<compile_context>
chip_gen: v5e
topology: v5e:2x2
jax: 0.10.0
libtpu: 0.0.40
codegen_flags: <defaults>
</compile_context>

<pallas_src>
import functools

import jax
import jax.numpy as jnp
import numpy as np
from jax.experimental import pallas as pl
from jax.experimental.pallas import tpu as pltpu


def _vmem_limit_bytes():
    """~3/4 of physical VMEM (96 MiB on v5e/v6e, 48 MiB on v7x)."""
    try:
        cap = pltpu.get_tpu_info().vmem_capacity_bytes
        return int(min(cap * 3 // 4, 100 * 1024 * 1024))
    except Exception:
        return 64 * 1024 * 1024


def _shift_time(h, offset, T):
    """out[:, t] = h[:, t + offset], zero-padded outside [0, T).

    Static slices + a lane-axis concat with a small zero block; replaces the old
    (H, T+2P) hpad scratch round-trip.  (For lane-multiple T this could also be a
    pltpu.roll + iota mask to push the shift onto the idle XLU slot.)
    """
    if offset == 0:
        return h
    if abs(offset) >= T:
        return jnp.zeros_like(h)
    z = jnp.zeros((h.shape[0], abs(offset)), h.dtype)
    if offset > 0:
        return jnp.concatenate([h[:, offset:], z], axis=1)
    return jnp.concatenate([z, h[:, :T + offset]], axis=1)


# ----------------------------------------------------------------------------
# Fused flow-block kernel: (ActNorm + InvConvNear) as one channel matmul, then
# CouplingBlock (start 1x1 -> WaveNet dilated stack -> end 1x1 -> affine).
# One batch element per grid step; tiles are (C, T): channel=sublane, time=lane.
# ----------------------------------------------------------------------------
def make_block_kernel(n_layers, ksize, dil_rate, hidden, half, T, sigmoid_scale,
                      compute_dtype):
    cd = compute_dtype  # matmul input dtype (bf16 for MXU speed; f32 accumulation)

    def kernel(x_ref, m_ref, A_ref, bv_ref, sw_ref, sb_ref, inw_ref, inb_ref,
               rsw_ref, rsb_ref, ew_ref, eb_ref, xo_ref, ld_ref, h_ref, acc_ref):
        x = x_ref[0]                         # (C, T) f32
        mask = m_ref[0]                      # (1, T) -> broadcasts over channels

        # --- ActNorm + InvConvNear fused into a single (C, C) f32 channel matmul ---
        y = (jnp.dot(A_ref[...], x, preferred_element_type=jnp.float32)
             + bv_ref[...]) * mask           # (C, T)
        x0 = y[:half, :]                     # (half, T)  -> passes through unchanged
        x1 = y[half:, :]                     # (half, T)

        # --- CouplingBlock start: weight-normed 1x1 conv (bf16 MXU, f32 acc) ---
        h_ref[...] = (jnp.dot(sw_ref[...], x0.astype(cd),
                              preferred_element_type=jnp.float32)
                      + sb_ref[...]) * mask                     # (H, T) f32
        acc_ref[...] = jnp.zeros((hidden, T), jnp.float32)      # skip accumulator

        for i in range(n_layers):
            d = dil_rate ** i
            pad = d * (ksize - 1) // 2
            h_cd = h_ref[...].astype(cd)
            # K accumulating per-tap matmuls: x_in += W_k @ shift(h, k*d - pad)
            # (identical MXU FLOPs as one (2H,K*H) matmul, no (K*H,T) concat temp)
            x_in = jnp.zeros((2 * hidden, T), jnp.float32)
            for k in range(ksize):
                tap = _shift_time(h_cd, k * d - pad, T)
                x_in = x_in + jnp.dot(inw_ref[i * ksize + k], tap,
                                      preferred_element_type=jnp.float32)
            x_in = x_in + inb_ref[i]                            # (2H, T) f32
            # gated activation (fused_add_tanh_sigmoid_multiply with g = 0), f32 VPU/EUP
            acts = jnp.tanh(x_in[:hidden, :]) * jax.nn.sigmoid(x_in[hidden:, :])
            # res/skip 1x1 conv
            rs = (jnp.dot(rsw_ref[i], acts.astype(cd),
                          preferred_element_type=jnp.float32)
                  + rsb_ref[i])                                  # (2H, T) f32
            if i < n_layers - 1:
                h_ref[...] = (h_ref[...] + rs[:hidden, :]) * mask
                acc_ref[...] = acc_ref[...] + rs[hidden:, :]
            else:
                acc_ref[...] = acc_ref[...] + rs[:hidden, :]

        out_wn = acc_ref[...] * mask
        # end 1x1 conv -> (m, logs)
        out = (jnp.dot(ew_ref[...], out_wn.astype(cd),
                       preferred_element_type=jnp.float32)
               + eb_ref[...])                # (C, T) f32
        m_c = out[:half, :]
        logs = out[half:, :]
        if sigmoid_scale:
            logs = jnp.log(1e-6 + jax.nn.sigmoid(logs + 2.0))

        z1 = (m_c + jnp.exp(logs) * x1) * mask
        # two sublane-aligned stores; no (C, T) concat temporary
        xo_ref[0, :half, :] = x0
        xo_ref[0, half:, :] = z1
        # coupling logdet fully reduced in-kernel (f32): lanes then sublanes
        ld_t = jnp.sum(logs * mask, axis=1, keepdims=True)       # (half, 1)
        ld_ref[0] = jnp.sum(ld_t, axis=0, keepdims=True)         # (1, 1)

    return kernel


def flow_block_apply(x, mask, A, bvec, sw, sb, inw_taps, inb, rsw, rsb, ew, eb,
                     hp, compute_dtype):
    B, C, T = x.shape
    H = hp["hidden"]
    nl, K = hp["n_layers"], hp["kernel_size"]
    half = C // 2
    kernel = make_block_kernel(nl, K, hp["dilation_rate"], H, half, T,
                               hp["sigmoid_scale"], compute_dtype)
    # grid-invariant weights: single-buffer (no double-buffer VMEM waste)
    const = dict(pipeline_mode=pl.Buffered(1))

    x_out, ld_part = pl.pallas_call(
        kernel,
        out_shape=(jax.ShapeDtypeStruct((B, C, T), jnp.float32),
                   jax.ShapeDtypeStruct((B, 1, 1), jnp.float32)),
        grid=(B,),
        in_specs=[
            pl.BlockSpec((1, C, T), lambda b: (b, 0, 0)),                 # x
            pl.BlockSpec((1, 1, T), lambda b: (b, 0, 0)),                 # mask
            pl.BlockSpec((C, C), lambda b: (0, 0), **const),              # fused ActNorm+InvConv
            pl.BlockSpec((C, 1), lambda b: (0, 0), **const),              # fused bias
            pl.BlockSpec((H, half), lambda b: (0, 0), **const),           # start w (cd)
            pl.BlockSpec((H, 1), lambda b: (0, 0), **const),              # start b
            pl.BlockSpec((nl * K, 2 * H, H), lambda b: (0, 0, 0), **const),  # per-tap in w (cd)
            pl.BlockSpec((nl, 2 * H, 1), lambda b: (0, 0, 0), **const),   # in-layer b
            pl.BlockSpec((nl, 2 * H, H), lambda b: (0, 0, 0), **const),   # res/skip w (cd)
            pl.BlockSpec((nl, 2 * H, 1), lambda b: (0, 0, 0), **const),   # res/skip b
            pl.BlockSpec((C, H), lambda b: (0, 0), **const),              # end w (cd)
            pl.BlockSpec((C, 1), lambda b: (0, 0), **const),              # end b
        ],
        out_specs=(pl.BlockSpec((1, C, T), lambda b: (b, 0, 0)),
                   pl.BlockSpec((1, 1, 1), lambda b: (b, 0, 0))),
        scratch_shapes=[pltpu.VMEM((H, T), jnp.float32),      # residual stream h
                        pltpu.VMEM((H, T), jnp.float32)],     # skip accumulator
        input_output_aliases={0: 0},       # x buffer reused for the block output
        compiler_params=pltpu.CompilerParams(
            dimension_semantics=("parallel",),
            vmem_limit_bytes=_vmem_limit_bytes()),
    )(x, mask, A, bvec, sw, sb, inw_taps, inb, rsw, rsb, ew, eb)
    return x_out, ld_part


# ----------------------------------------------------------------------------
# Fold the InvConvNear channel-group permutation + grouped matmul into a single
# dense (C, C) channel-mixing matrix (the op is linear over channels).
# ----------------------------------------------------------------------------
def build_invconv_matrix(w, C, ns):
    prec = jax.lax.Precision.HIGHEST
    x = jnp.eye(C, dtype=jnp.float32)[:, :, None]                        # (C, C, 1)
    xp = x.reshape(C, 2, C // ns, ns // 2, 1).transpose(0, 1, 3, 2, 4) \
          .reshape(C, ns, C // ns, 1)
    z = jnp.einsum("ij,bjkt->bikt", w, xp, precision=prec)
    z = z.reshape(C, 2, ns // 2, C // ns, 1).transpose(0, 1, 3, 2, 4) \
         .reshape(C, C, 1)
    return z[:, :, 0].T                                                  # (C_out, C_in)


# ----------------------------------------------------------------------------
# Full FlowSpecDecoder.forward (reverse=False), Pallas path
# ----------------------------------------------------------------------------
def pallas_forward(x, x_lengths, params, hp, compute_dtype=jnp.bfloat16):
    n_sqz, ns = hp["n_sqz"], hp["n_split"]
    H, K, nl = hp["hidden"], hp["kernel_size"], hp["n_layers"]
    B, Cm, T_in = x.shape
    # preprocess
    t_max = (T_in // n_sqz) * n_sqz
    x = x[:, :, :t_max]
    x_lengths = (x_lengths // n_sqz) * n_sqz
    mask_full = (jnp.arange(t_max)[None, :] < x_lengths[:, None]).astype(x.dtype)[:, None, :]
    # squeeze (once per forward)
    x = x.reshape(B, Cm, t_max // n_sqz, n_sqz).transpose(0, 3, 1, 2) \
         .reshape(B, Cm * n_sqz, t_max // n_sqz)
    mask = mask_full[:, :, n_sqz - 1::n_sqz]
    x = x * mask
    C, T = Cm * n_sqz, t_max // n_sqz
    x_len = jnp.sum(mask, axis=(1, 2))
    logdet_tot = jnp.zeros((B,), jnp.float32)
    cd = compute_dtype

    for blk in params:
        # fold ActNorm scale/bias through the grouped 1x1 conv (tiny, once per trace)
        M = build_invconv_matrix(blk["inv_w"], C, ns)
        A = M * jnp.exp(blk["an_logs"][:, 0])[None, :]
        bvec = jnp.dot(M, blk["an_bias"], precision=jax.lax.Precision.HIGHEST)
        p = blk["cpl"]
        # (nl, 2H, H, K) -> (nl*K, 2H, H): row block i*K+k holds layer-i tap-k weights
        inw_taps = jnp.transpose(p["inw"], (0, 3, 1, 2)).reshape(nl * K, 2 * H, H).astype(cd)

        x, ld_part = flow_block_apply(
            x, mask, A, bvec,
            p["sw"].astype(cd), p["sb"], inw_taps, p["inb"],
            p["rsw"].astype(cd), p["rsb"], p["ew"].astype(cd), p["eb"],
            hp, cd)
        logdet_tot = (logdet_tot
                      + jnp.sum(blk["an_logs"]) * x_len
                      + blk["inv_logdet_w"] * (C / ns) * x_len
                      + ld_part[:, 0, 0])

    # unsqueeze
    x = x.reshape(B, n_sqz, C // n_sqz, T).transpose(0, 2, 1, 3).reshape(B, C // n_sqz, T * n_sqz)
    mask_un = jnp.repeat(mask[:, :, :, None], n_sqz, axis=3).reshape(B, 1, T * n_sqz)
    x = x * mask_un
    return x, x_lengths, logdet_tot


# ----------------------------------------------------------------------------
# Pure-JAX (XLA) reference for cross-checking the Pallas kernels
# ----------------------------------------------------------------------------
def reference_forward(x, x_lengths, params, hp):
    n_sqz, ns = hp["n_sqz"], hp["n_split"]
    H, K, dr, nl = hp["hidden"], hp["kernel_size"], hp["dilation_rate"], hp["n_layers"]
    prec = jax.lax.Precision.HIGHEST
    B, Cm, T_in = x.shape
    t_max = (T_in // n_sqz) * n_sqz
    x = x[:, :, :t_max]
    x_lengths = (x_lengths // n_sqz) * n_sqz
    mask = (jnp.arange(t_max)[None, :] < x_lengths[:, None]).astype(x.dtype)[:, None, :]
    x = x.reshape(B, Cm, t_max // n_sqz, n_sqz).transpose(0, 3, 1, 2) \
         .reshape(B, Cm * n_sqz, t_max // n_sqz)
    mask = mask[:, :, n_sqz - 1::n_sqz]
    x = x * mask
    C, T = Cm * n_sqz, t_max // n_sqz
    half = C // 2
    x_len = jnp.sum(mask, axis=(1, 2))
    logdet_tot = jnp.zeros((B,), jnp.float32)

    for blk in params:
        # ActNorm
        x = (blk["an_bias"][None] + jnp.exp(blk["an_logs"])[None] * x) * mask
        logdet_tot = logdet_tot + jnp.sum(blk["an_logs"]) * x_len

        # InvConvNear
        xp = x.reshape(B, 2, C // ns, ns // 2, T).transpose(0, 1, 3, 2, 4) \
              .reshape(B, ns, C // ns, T)
        z = jnp.einsum("ij,bjkt->bikt", blk["inv_w"], xp, precision=prec)
        x = z.reshape(B, 2, ns // 2, C // ns, T).transpose(0, 1, 3, 2, 4) \
             .reshape(B, C, T) * mask
        logdet_tot = logdet_tot + blk["inv_logdet_w"] * (C / ns) * x_len

        # CouplingBlock + WN
        p = blk["cpl"]
        x0, x1 = x[:, :half], x[:, half:]
        h = (jnp.einsum("oc,bct->bot", p["sw"], x0, precision=prec) + p["sb"][None]) * mask
        out_acc = jnp.zeros_like(h)
        for i in range(nl):
            d = dr ** i
            pad = d * (K - 1) // 2
            x_in = jax.lax.conv_general_dilated(
                h, p["inw"][i], window_strides=(1,), padding=[(pad, pad)],
                rhs_dilation=(d,), dimension_numbers=("NCH", "OIH", "NCH"),
                precision=prec) + p["inb"][i][None]
            acts = jnp.tanh(x_in[:, :H]) * jax.nn.sigmoid(x_in[:, H:])
            rs = jnp.einsum("oc,bct->bot", p["rsw"][i], acts, precision=prec) + p["rsb"][i][None]
            if i < nl - 1:
                h = (h + rs[:, :H]) * mask
                out_acc = out_acc + rs[:, H:]
            else:
                out_acc = out_acc + rs[:, :H]
        out_acc = out_acc * mask
        out = jnp.einsum("oc,bct->bot", p["ew"], out_acc, precision=prec) + p["eb"][None]
        m_c, logs = out[:, :half], out[:, half:]
        if hp["sigmoid_scale"]:
            logs = jnp.log(1e-6 + jax.nn.sigmoid(logs + 2.0))
        z1 = (m_c + jnp.exp(logs) * x1) * mask
        x = jnp.concatenate([x0, z1], axis=1)
        logdet_tot = logdet_tot + jnp.sum(logs * mask, axis=(1, 2))

    x = x.reshape(B, n_sqz, C // n_sqz, T).transpose(0, 2, 1, 3).reshape(B, C // n_sqz, T * n_sqz)
    mask_un = jnp.repeat(mask[:, :, :, None], n_sqz, axis=3).reshape(B, 1, T * n_sqz)
    x = x * mask_un
    return x, x_lengths, logdet_tot


# ----------------------------------------------------------------------------
# Deterministic parameter init (shapes follow FlowSpecDecoder.__init__).
# NOTE: PyTorch zero-inits the coupling `end` conv and ActNorm params; we use
# small deterministic random values instead so the full compute path is
# exercised / verifiable.
# ----------------------------------------------------------------------------
def init_params(key, hp):
    C = hp["n_mel_channels"] * hp["n_sqz"]
    H = hp["hidden"]
    half = C // 2
    nl, K, ns = hp["n_layers"], hp["kernel_size"], hp["n_split"]
    params = []
    for _ in range(hp["n_blocks"]):
        key, *ks = jax.random.split(key, 12)
        an_logs = 0.1 * jax.random.normal(ks[0], (C, 1), jnp.float32)
        an_bias = 0.1 * jax.random.normal(ks[1], (C, 1), jnp.float32)
        w0 = jax.random.normal(ks[2], (ns, ns), jnp.float32)
        q, _ = jnp.linalg.qr(w0)
        q = jnp.where(jnp.linalg.det(q) < 0, q.at[:, 0].multiply(-1.0), q)
        inv_logdet_w = jnp.linalg.slogdet(q)[1]
        sw = 0.1 * jax.random.normal(ks[3], (H, half), jnp.float32)              # start conv (O, I)
        sb = 0.1 * jax.random.normal(ks[4], (H, 1), jnp.float32)
        inw = 0.1 * jax.random.normal(ks[5], (nl, 2 * H, H, K), jnp.float32)     # in_layers (O, I, K)
        inb = 0.1 * jax.random.normal(ks[6], (nl, 2 * H, 1), jnp.float32)
        rsw = 0.1 * jax.random.normal(ks[7], (nl, 2 * H, H), jnp.float32)        # res/skip (O, I)
        rsw = rsw.at[nl - 1, H:, :].set(0.0)   # last layer maps H->H only
        rsb = 0.1 * jax.random.normal(ks[8], (nl, 2 * H, 1), jnp.float32)
        rsb = rsb.at[nl - 1, H:, :].set(0.0)
        ew = 0.05 * jax.random.normal(ks[9], (C, H), jnp.float32)                # end conv (O, I)
        eb = 0.05 * jax.random.normal(ks[10], (C, 1), jnp.float32)
        params.append(dict(
            an_logs=an_logs, an_bias=an_bias, inv_w=q, inv_logdet_w=inv_logdet_w,
            cpl=dict(sw=sw, sb=sb, inw=inw, inb=inb, rsw=rsw, rsb=rsb, ew=ew, eb=eb)))
    return params


if __name__ == "__main__":
    hp = dict(n_mel_channels=8, hidden=32, kernel_size=3, dilation_rate=2,
              n_blocks=2, n_layers=2, p_dropout=0.0, n_split=4, n_sqz=2,
              sigmoid_scale=False, gin_channels=0)

    key = jax.random.PRNGKey(0)
    kx, _ = jax.random.split(key)
    B, T_in = 2, 16
    x = jax.random.normal(kx, (B, hp["n_mel_channels"], T_in), jnp.float32)
    x_lengths = jnp.array([16, 12], jnp.int32)      # max length == T_in (module assert)
    params = init_params(jax.random.PRNGKey(1), hp)

    # ground-truth f32 reference
    z_ref, zl_ref, ld_ref = reference_forward(x, x_lengths, params, hp)

    # 1) strict validation of the fused kernels with f32 matmuls
    fwd_f32 = jax.jit(functools.partial(pallas_forward, hp=hp, compute_dtype=jnp.float32))
    z32, zl32, ld32 = fwd_f32(x, x_lengths, params)
    jax.block_until_ready((z32, zl32, ld32))
    assert z32.shape == (B, hp["n_mel_channels"], T_in)
    assert np.allclose(np.asarray(z32), np.asarray(z_ref), atol=2e-3, rtol=2e-3), \
        f"f32 max |dz| = {np.abs(np.asarray(z32) - np.asarray(z_ref)).max()}"
    assert np.allclose(np.asarray(ld32), np.asarray(ld_ref), atol=2e-3, rtol=2e-3), \
        f"f32 logdet mismatch: {np.asarray(ld32)} vs {np.asarray(ld_ref)}"
    assert np.array_equal(np.asarray(zl32), np.asarray(zl_ref))

    # 2) production bf16-MXU path (weights + matmul activations bf16, f32 accumulation);
    #    looser tolerance reflects bf16 rounding — the tight check above covers the logic.
    fwd_bf16 = jax.jit(functools.partial(pallas_forward, hp=hp, compute_dtype=jnp.bfloat16))
    z16, zl16, ld16 = fwd_bf16(x, x_lengths, params)
    jax.block_until_ready((z16, zl16, ld16))
    assert np.allclose(np.asarray(z16), np.asarray(z_ref), atol=6e-2, rtol=6e-2), \
        f"bf16 max |dz| = {np.abs(np.asarray(z16) - np.asarray(z_ref)).max()}"
    assert np.allclose(np.asarray(ld16), np.asarray(ld_ref), atol=3e-1, rtol=1.5e-1), \
        f"bf16 logdet mismatch: {np.asarray(ld16)} vs {np.asarray(ld_ref)}"
    assert np.array_equal(np.asarray(zl16), np.asarray(zl_ref))

    print("KERNEL_OK")
</pallas_src>

<mosaic_0001>
module attributes {stable_mosaic.version = 11 : i64} {
  func.func @kernel(%arg0: i32, %arg1: memref<1x16x8xf32, #tpu.memory_space<vmem>>, %arg2: memref<1x1x8xf32, #tpu.memory_space<vmem>>, %arg3: memref<16x16xf32, #tpu.memory_space<vmem>>, %arg4: memref<16x1xf32, #tpu.memory_space<vmem>>, %arg5: memref<32x8xf32, #tpu.memory_space<vmem>>, %arg6: memref<32x1xf32, #tpu.memory_space<vmem>>, %arg7: memref<6x64x32xf32, #tpu.memory_space<vmem>>, %arg8: memref<2x64x1xf32, #tpu.memory_space<vmem>>, %arg9: memref<2x64x32xf32, #tpu.memory_space<vmem>>, %arg10: memref<2x64x1xf32, #tpu.memory_space<vmem>>, %arg11: memref<16x32xf32, #tpu.memory_space<vmem>>, %arg12: memref<16x1xf32, #tpu.memory_space<vmem>>, %arg13: memref<1x16x8xf32, #tpu.memory_space<vmem>>, %arg14: memref<1x1x1xf32, #tpu.memory_space<vmem>>, %arg15: memref<32x8xf32, #tpu.memory_space<vmem>>, %arg16: memref<32x8xf32, #tpu.memory_space<vmem>>) attributes {dimension_semantics = [#tpu.dimension_semantics<parallel>], iteration_bounds = array<i64: 2>, scalar_prefetch = 0 : i64, scratch_operands = 2 : i64, tpu.core_type = #tpu.core_type<tc>, window_params = [{transform_indices = @transform_0, window_bounds = array<i64: 1, 16, 8>}, {transform_indices = @transform_1, window_bounds = array<i64: 1, 1, 8>}, {pipeline_mode = #tpu.pipeline_mode<synchronous>, transform_indices = @transform_2, window_bounds = array<i64: 16, 16>}, {pipeline_mode = #tpu.pipeline_mode<synchronous>, transform_indices = @transform_3, window_bounds = array<i64: 16, 1>}, {pipeline_mode = #tpu.pipeline_mode<synchronous>, transform_indices = @transform_4, window_bounds = array<i64: 32, 8>}, {pipeline_mode = #tpu.pipeline_mode<synchronous>, transform_indices = @transform_5, window_bounds = array<i64: 32, 1>}, {pipeline_mode = #tpu.pipeline_mode<synchronous>, transform_indices = @transform_6, window_bounds = array<i64: 6, 64, 32>}, {pipeline_mode = #tpu.pipeline_mode<synchronous>, transform_indices = @transform_7, window_bounds = array<i64: 2, 64, 1>}, {pipeline_mode = #tpu.pipeline_mode<synchronous>, transform_indices = @transform_8, window_bounds = array<i64: 2, 64, 32>}, {pipeline_mode = #tpu.pipeline_mode<synchronous>, transform_indices = @transform_9, window_bounds = array<i64: 2, 64, 1>}, {pipeline_mode = #tpu.pipeline_mode<synchronous>, transform_indices = @transform_10, window_bounds = array<i64: 16, 32>}, {pipeline_mode = #tpu.pipeline_mode<synchronous>, transform_indices = @transform_11, window_bounds = array<i64: 16, 1>}, {transform_indices = @transform_12, window_bounds = array<i64: 1, 16, 8>}, {transform_indices = @transform_13, window_bounds = array<i64: 1, 1, 1>}]} {
    %c0 = arith.constant 0 : index
    %c0_0 = arith.constant 0 : index
    %c0_1 = arith.constant 0 : index
    %0 = vector.load %arg1[%c0, %c0_0, %c0_1] : memref<1x16x8xf32, #tpu.memory_space<vmem>>, vector<1x16x8xf32>
    %1 = vector.shape_cast %0 : vector<1x16x8xf32> to vector<16x8xf32>
    %c0_2 = arith.constant 0 : index
    %c0_3 = arith.constant 0 : index
    %c0_4 = arith.constant 0 : index
    %2 = vector.load %arg2[%c0_2, %c0_3, %c0_4] : memref<1x1x8xf32, #tpu.memory_space<vmem>>, vector<1x1x8xf32>
    %3 = vector.shape_cast %2 : vector<1x1x8xf32> to vector<1x8xf32>
    %c0_5 = arith.constant 0 : index
    %c0_6 = arith.constant 0 : index
    %4 = vector.load %arg3[%c0_5, %c0_6] : memref<16x16xf32, #tpu.memory_space<vmem>>, vector<16x16xf32>
    %cst = arith.constant dense<0.000000e+00> : vector<16x8xf32>
    %5 = tpu.matmul %4, %1, %cst {dimension_numbers = #tpu.dot_dimension_numbers<[1], [0], [0], [1], [0, 0, 1, 1], [], []>} : vector<16x16xf32>, vector<16x8xf32>, vector<16x8xf32> -> vector<16x8xf32>
    %c0_7 = arith.constant 0 : index
    %c0_8 = arith.constant 0 : index
    %6 = vector.load %arg4[%c0_7, %c0_8] : memref<16x1xf32, #tpu.memory_space<vmem>>, vector<16x1xf32>
    %7 = vector.broadcast %6 : vector<16x1xf32> to vector<16x8xf32>
    %8 = arith.addf %5, %7 : vector<16x8xf32>
    %9 = vector.broadcast %3 : vector<1x8xf32> to vector<16x8xf32>
    %10 = arith.mulf %8, %9 : vector<16x8xf32>
    %11 = vector.extract_strided_slice %10 {offsets = [0, 0], sizes = [8, 8], strides = [1, 1]} : vector<16x8xf32> to vector<8x8xf32>
    %12 = vector.extract_strided_slice %10 {offsets = [8, 0], sizes = [8, 8], strides = [1, 1]} : vector<16x8xf32> to vector<8x8xf32>
    %c0_9 = arith.constant 0 : index
    %c0_10 = arith.constant 0 : index
    %13 = vector.load %arg5[%c0_9, %c0_10] : memref<32x8xf32, #tpu.memory_space<vmem>>, vector<32x8xf32>
    %cst_11 = arith.constant dense<0.000000e+00> : vector<32x8xf32>
    %14 = tpu.matmul %13, %11, %cst_11 {dimension_numbers = #tpu.dot_dimension_numbers<[1], [0], [0], [1], [0, 0, 1, 1], [], []>} : vector<32x8xf32>, vector<8x8xf32>, vector<32x8xf32> -> vector<32x8xf32>
    %c0_12 = arith.constant 0 : index
    %c0_13 = arith.constant 0 : index
    %15 = vector.load %arg6[%c0_12, %c0_13] : memref<32x1xf32, #tpu.memory_space<vmem>>, vector<32x1xf32>
    %16 = vector.broadcast %15 : vector<32x1xf32> to vector<32x8xf32>
    %17 = arith.addf %14, %16 : vector<32x8xf32>
    %18 = vector.broadcast %3 : vector<1x8xf32> to vector<32x8xf32>
    %19 = arith.mulf %17, %18 : vector<32x8xf32>
    %c0_14 = arith.constant 0 : index
    %c0_15 = arith.constant 0 : index
    %20 = vector.load %arg15[%c0_14, %c0_15] : memref<32x8xf32, #tpu.memory_space<vmem>>, vector<32x8xf32>
    tpu.vector_store %arg15[%c0_14, %c0_15], %19 {strides = array<i32>} : memref<32x8xf32, #tpu.memory_space<vmem>>, vector<32x8xf32>,
    %cst_16 = arith.constant 0.000000e+00 : f32
    %21 = vector.broadcast %cst_16 : f32 to vector<32x8xf32>
    %c0_17 = arith.constant 0 : index
    %c0_18 = arith.constant 0 : index
    %22 = vector.load %arg16[%c0_17, %c0_18] : memref<32x8xf32, #tpu.memory_space<vmem>>, vector<32x8xf32>
    tpu.vector_store %arg16[%c0_17, %c0_18], %21 {strides = array<i32>} : memref<32x8xf32, #tpu.memory_space<vmem>>, vector<32x8xf32>,
    %c0_19 = arith.constant 0 : index
    %c0_20 = arith.constant 0 : index
    %23 = vector.load %arg15[%c0_19, %c0_20] : memref<32x8xf32, #tpu.memory_space<vmem>>, vector<32x8xf32>
    %cst_21 = arith.constant 0.000000e+00 : f32
    %24 = vector.broadcast %cst_21 : f32 to vector<64x8xf32>
    %cst_22 = arith.constant 0.000000e+00 : f32
    %25 = vector.broadcast %cst_22 : f32 to vector<32x1xf32>
    %26 = vector.extract_strided_slice %23 {offsets = [0, 0], sizes = [32, 7], strides = [1, 1]} : vector<32x8xf32> to vector<32x7xf32>
    %27 = tpu.concatenate %25, %26 in 1 : vector<32x1xf32>, vector<32x7xf32> -> vector<32x8xf32>
    %c0_23 = arith.constant 0 : index
    %c0_24 = arith.constant 0 : index
    %c0_25 = arith.constant 0 : index
    %28 = vector.load %arg7[%c0_23, %c0_24, %c0_25] : memref<6x64x32xf32, #tpu.memory_space<vmem>>, vector<1x64x32xf32>
    %29 = vector.shape_cast %28 : vector<1x64x32xf32> to vector<64x32xf32>
    %cst_26 = arith.constant dense<0.000000e+00> : vector<64x8xf32>
    %30 = tpu.matmul %29, %27, %cst_26 {dimension_numbers = #tpu.dot_dimension_numbers<[1], [0], [0], [1], [0, 0, 1, 1], [], []>} : vector<64x32xf32>, vector<32x8xf32>, vector<64x8xf32> -> vector<64x8xf32>
    %31 = arith.addf %24, %30 : vector<64x8xf32>
    %c1 = arith.constant 1 : index
    %c0_27 = arith.constant 0 : index
    %c0_28 = arith.constant 0 : index
    %32 = vector.load %arg7[%c1, %c0_27, %c0_28] : memref<6x64x32xf32, #tpu.memory_space<vmem>>, vector<1x64x32xf32>
    %33 = vector.shape_cast %32 : vector<1x64x32xf32> to vector<64x32xf32>
    %cst_29 = arith.constant dense<0.000000e+00> : vector<64x8xf32>
    %34 = tpu.matmul %33, %23, %cst_29 {dimension_numbers = #tpu.dot_dimension_numbers<[1], [0], [0], [1], [0, 0, 1, 1], [], []>} : vector<64x32xf32>, vector<32x8xf32>, vector<64x8xf32> -> vector<64x8xf32>
    %35 = arith.addf %31, %34 : vector<64x8xf32>
    %cst_30 = arith.constant 0.000000e+00 : f32
    %36 = vector.broadcast %cst_30 : f32 to vector<32x1xf32>
    %37 = vector.extract_strided_slice %23 {offsets = [0, 1], sizes = [32, 7], strides = [1, 1]} : vector<32x8xf32> to vector<32x7xf32>
    %38 = tpu.concatenate %37, %36 in 1 : vector<32x7xf32>, vector<32x1xf32> -> vector<32x8xf32>
    %c2 = arith.constant 2 : index
    %c0_31 = arith.constant 0 : index
    %c0_32 = arith.constant 0 : index
    %39 = vector.load %arg7[%c2, %c0_31, %c0_32] : memref<6x64x32xf32, #tpu.memory_space<vmem>>, vector<1x64x32xf32>
    %40 = vector.shape_cast %39 : vector<1x64x32xf32> to vector<64x32xf32>
    %cst_33 = arith.constant dense<0.000000e+00> : vector<64x8xf32>
    %41 = tpu.matmul %40, %38, %cst_33 {dimension_numbers = #tpu.dot_dimension_numbers<[1], [0], [0], [1], [0, 0, 1, 1], [], []>} : vector<64x32xf32>, vector<32x8xf32>, vector<64x8xf32> -> vector<64x8xf32>
    %42 = arith.addf %35, %41 : vector<64x8xf32>
    %c0_34 = arith.constant 0 : index
    %c0_35 = arith.constant 0 : index
    %c0_36 = arith.constant 0 : index
    %43 = vector.load %arg8[%c0_34, %c0_35, %c0_36] : memref<2x64x1xf32, #tpu.memory_space<vmem>>, vector<1x64x1xf32>
    %44 = vector.shape_cast %43 : vector<1x64x1xf32> to vector<64x1xf32>
    %45 = vector.broadcast %44 : vector<64x1xf32> to vector<64x8xf32>
    %46 = arith.addf %42, %45 : vector<64x8xf32>
    %47 = vector.extract_strided_slice %46 {offsets = [0, 0], sizes = [32, 8], strides = [1, 1]} : vector<64x8xf32> to vector<32x8xf32>
    %48 = math.tanh %47 : vector<32x8xf32>
    %49 = vector.extract_strided_slice %46 {offsets = [32, 0], sizes = [32, 8], strides = [1, 1]} : vector<64x8xf32> to vector<32x8xf32>
    %50 = arith.negf %49 : vector<32x8xf32>
    %51 = math.exp %50 : vector<32x8xf32>
    %cst_37 = arith.constant 1.000000e+00 : f32
    %52 = vector.broadcast %cst_37 : f32 to vector<32x8xf32>
    %53 = arith.addf %52, %51 : vector<32x8xf32>
    %54 = arith.divf %52, %53 : vector<32x8xf32>
    %55 = arith.mulf %48, %54 : vector<32x8xf32>
    %c0_38 = arith.constant 0 : index
    %c0_39 = arith.constant 0 : index
    %c0_40 = arith.constant 0 : index
    %56 = vector.load %arg9[%c0_38, %c0_39, %c0_40] : memref<2x64x32xf32, #tpu.memory_space<vmem>>, vector<1x64x32xf32>
    %57 = vector.shape_cast %56 : vector<1x64x32xf32> to vector<64x32xf32>
    %cst_41 = arith.constant dense<0.000000e+00> : vector<64x8xf32>
    %58 = tpu.matmul %57, %55, %cst_41 {dimension_numbers = #tpu.dot_dimension_numbers<[1], [0], [0], [1], [0, 0, 1, 1], [], []>} : vector<64x32xf32>, vector<32x8xf32>, vector<64x8xf32> -> vector<64x8xf32>
    %c0_42 = arith.constant 0 : index
    %c0_43 = arith.constant 0 : index
    %c0_44 = arith.constant 0 : index
    %59 = vector.load %arg10[%c0_42, %c0_43, %c0_44] : memref<2x64x1xf32, #tpu.memory_space<vmem>>, vector<1x64x1xf32>
    %60 = vector.shape_cast %59 : vector<1x64x1xf32> to vector<64x1xf32>
    %61 = vector.broadcast %60 : vector<64x1xf32> to vector<64x8xf32>
    %62 = arith.addf %58, %61 : vector<64x8xf32>
    %c0_45 = arith.constant 0 : index
    %c0_46 = arith.constant 0 : index
    %63 = vector.load %arg15[%c0_45, %c0_46] : memref<32x8xf32, #tpu.memory_space<vmem>>, vector<32x8xf32>
    %64 = vector.extract_strided_slice %62 {offsets = [0, 0], sizes = [32, 8], strides = [1, 1]} : vector<64x8xf32> to vector<32x8xf32>
    %65 = arith.addf %63, %64 : vector<32x8xf32>
    %66 = vector.broadcast %3 : vector<1x8xf32> to vector<32x8xf32>
    %67 = arith.mulf %65, %66 : vector<32x8xf32>
    %c0_47 = arith.constant 0 : index
    %c0_48 = arith.constant 0 : index
    %68 = vector.load %arg15[%c0_47, %c0_48] : memref<32x8xf32, #tpu.memory_space<vmem>>, vector<32x8xf32>
    tpu.vector_store %arg15[%c0_47, %c0_48], %67 {strides = array<i32>} : memref<32x8xf32, #tpu.memory_space<vmem>>, vector<32x8xf32>,
    %c0_49 = arith.constant 0 : index
    %c0_50 = arith.constant 0 : index
    %69 = vector.load %arg16[%c0_49, %c0_50] : memref<32x8xf32, #tpu.memory_space<vmem>>, vector<32x8xf32>
    %70 = vector.extract_strided_slice %62 {offsets = [32, 0], sizes = [32, 8], strides = [1, 1]} : vector<64x8xf32> to vector<32x8xf32>
    %71 = arith.addf %69, %70 : vector<32x8xf32>
    %c0_51 = arith.constant 0 : index
    %c0_52 = arith.constant 0 : index
    %72 = vector.load %arg16[%c0_51, %c0_52] : memref<32x8xf32, #tpu.memory_space<vmem>>, vector<32x8xf32>
    tpu.vector_store %arg16[%c0_51, %c0_52], %71 {strides = array<i32>} : memref<32x8xf32, #tpu.memory_space<vmem>>, vector<32x8xf32>,
    %c0_53 = arith.constant 0 : index
    %c0_54 = arith.constant 0 : index
    %73 = vector.load %arg15[%c0_53, %c0_54] : memref<32x8xf32, #tpu.memory_space<vmem>>, vector<32x8xf32>
    %cst_55 = arith.constant 0.000000e+00 : f32
    %74 = vector.broadcast %cst_55 : f32 to vector<64x8xf32>
    %cst_56 = arith.constant 0.000000e+00 : f32
    %75 = vector.broadcast %cst_56 : f32 to vector<32x2xf32>
    %76 = vector.extract_strided_slice %73 {offsets = [0, 0], sizes = [32, 6], strides = [1, 1]} : vector<32x8xf32> to vector<32x6xf32>
    %77 = tpu.concatenate %75, %76 in 1 : vector<32x2xf32>, vector<32x6xf32> -> vector<32x8xf32>
    %c3 = arith.constant 3 : index
    %c0_57 = arith.constant 0 : index
    %c0_58 = arith.constant 0 : index
    %78 = vector.load %arg7[%c3, %c0_57, %c0_58] : memref<6x64x32xf32, #tpu.memory_space<vmem>>, vector<1x64x32xf32>
    %79 = vector.shape_cast %78 : vector<1x64x32xf32> to vector<64x32xf32>
    %cst_59 = arith.constant dense<0.000000e+00> : vector<64x8xf32>
    %80 = tpu.matmul %79, %77, %cst_59 {dimension_numbers = #tpu.dot_dimension_numbers<[1], [0], [0], [1], [0, 0, 1, 1], [], []>} : vector<64x32xf32>, vector<32x8xf32>, vector<64x8xf32> -> vector<64x8xf32>
    %81 = arith.addf %74, %80 : vector<64x8xf32>
    %c4 = arith.constant 4 : index
    %c0_60 = arith.constant 0 : index
    %c0_61 = arith.constant 0 : index
    %82 = vector.load %arg7[%c4, %c0_60, %c0_61] : memref<6x64x32xf32, #tpu.memory_space<vmem>>, vector<1x64x32xf32>
    %83 = vector.shape_cast %82 : vector<1x64x32xf32> to vector<64x32xf32>
    %cst_62 = arith.constant dense<0.000000e+00> : vector<64x8xf32>
    %84 = tpu.matmul %83, %73, %cst_62 {dimension_numbers = #tpu.dot_dimension_numbers<[1], [0], [0], [1], [0, 0, 1, 1], [], []>} : vector<64x32xf32>, vector<32x8xf32>, vector<64x8xf32> -> vector<64x8xf32>
    %85 = arith.addf %81, %84 : vector<64x8xf32>
    %cst_63 = arith.constant 0.000000e+00 : f32
    %86 = vector.broadcast %cst_63 : f32 to vector<32x2xf32>
    %87 = vector.extract_strided_slice %73 {offsets = [0, 2], sizes = [32, 6], strides = [1, 1]} : vector<32x8xf32> to vector<32x6xf32>
    %88 = tpu.concatenate %87, %86 in 1 : vector<32x6xf32>, vector<32x2xf32> -> vector<32x8xf32>
    %c5 = arith.constant 5 : index
    %c0_64 = arith.constant 0 : index
    %c0_65 = arith.constant 0 : index
    %89 = vector.load %arg7[%c5, %c0_64, %c0_65] : memref<6x64x32xf32, #tpu.memory_space<vmem>>, vector<1x64x32xf32>
    %90 = vector.shape_cast %89 : vector<1x64x32xf32> to vector<64x32xf32>
    %cst_66 = arith.constant dense<0.000000e+00> : vector<64x8xf32>
    %91 = tpu.matmul %90, %88, %cst_66 {dimension_numbers = #tpu.dot_dimension_numbers<[1], [0], [0], [1], [0, 0, 1, 1], [], []>} : vector<64x32xf32>, vector<32x8xf32>, vector<64x8xf32> -> vector<64x8xf32>
    %92 = arith.addf %85, %91 : vector<64x8xf32>
    %c1_67 = arith.constant 1 : index
    %c0_68 = arith.constant 0 : index
    %c0_69 = arith.constant 0 : index
    %93 = vector.load %arg8[%c1_67, %c0_68, %c0_69] : memref<2x64x1xf32, #tpu.memory_space<vmem>>, vector<1x64x1xf32>
    %94 = vector.shape_cast %93 : vector<1x64x1xf32> to vector<64x1xf32>
    %95 = vector.broadcast %94 : vector<64x1xf32> to vector<64x8xf32>
    %96 = arith.addf %92, %95 : vector<64x8xf32>
    %97 = vector.extract_strided_slice %96 {offsets = [0, 0], sizes = [32, 8], strides = [1, 1]} : vector<64x8xf32> to vector<32x8xf32>
    %98 = math.tanh %97 : vector<32x8xf32>
    %99 = vector.extract_strided_slice %96 {offsets = [32, 0], sizes = [32, 8], strides = [1, 1]} : vector<64x8xf32> to vector<32x8xf32>
    %100 = arith.negf %99 : vector<32x8xf32>
    %101 = math.exp %100 : vector<32x8xf32>
    %cst_70 = arith.constant 1.000000e+00 : f32
    %102 = vector.broadcast %cst_70 : f32 to vector<32x8xf32>
    %103 = arith.addf %102, %101 : vector<32x8xf32>
    %104 = arith.divf %102, %103 : vector<32x8xf32>
    %105 = arith.mulf %98, %104 : vector<32x8xf32>
    %c1_71 = arith.constant 1 : index
    %c0_72 = arith.constant 0 : index
    %c0_73 = arith.constant 0 : index
    %106 = vector.load %arg9[%c1_71, %c0_72, %c0_73] : memref<2x64x32xf32, #tpu.memory_space<vmem>>, vector<1x64x32xf32>
    %107 = vector.shape_cast %106 : vector<1x64x32xf32> to vector<64x32xf32>
    %cst_74 = arith.constant dense<0.000000e+00> : vector<64x8xf32>
    %108 = tpu.matmul %107, %105, %cst_74 {dimension_numbers = #tpu.dot_dimension_numbers<[1], [0], [0], [1], [0, 0, 1, 1], [], []>} : vector<64x32xf32>, vector<32x8xf32>, vector<64x8xf32> -> vector<64x8xf32>
    %c1_75 = arith.constant 1 : index
    %c0_76 = arith.constant 0 : index
    %c0_77 = arith.constant 0 : index
    %109 = vector.load %arg10[%c1_75, %c0_76, %c0_77] : memref<2x64x1xf32, #tpu.memory_space<vmem>>, vector<1x64x1xf32>
    %110 = vector.shape_cast %109 : vector<1x64x1xf32> to vector<64x1xf32>
    %111 = vector.broadcast %110 : vector<64x1xf32> to vector<64x8xf32>
    %112 = arith.addf %108, %111 : vector<64x8xf32>
    %c0_78 = arith.constant 0 : index
    %c0_79 = arith.constant 0 : index
    %113 = vector.load %arg16[%c0_78, %c0_79] : memref<32x8xf32, #tpu.memory_space<vmem>>, vector<32x8xf32>
    %114 = vector.extract_strided_slice %112 {offsets = [0, 0], sizes = [32, 8], strides = [1, 1]} : vector<64x8xf32> to vector<32x8xf32>
    %115 = arith.addf %113, %114 : vector<32x8xf32>
    %c0_80 = arith.constant 0 : index
    %c0_81 = arith.constant 0 : index
    %116 = vector.load %arg16[%c0_80, %c0_81] : memref<32x8xf32, #tpu.memory_space<vmem>>, vector<32x8xf32>
    tpu.vector_store %arg16[%c0_80, %c0_81], %115 {strides = array<i32>} : memref<32x8xf32, #tpu.memory_space<vmem>>, vector<32x8xf32>,
    %c0_82 = arith.constant 0 : index
    %c0_83 = arith.constant 0 : index
    %117 = vector.load %arg16[%c0_82, %c0_83] : memref<32x8xf32, #tpu.memory_space<vmem>>, vector<32x8xf32>
    %118 = vector.broadcast %3 : vector<1x8xf32> to vector<32x8xf32>
    %119 = arith.mulf %117, %118 : vector<32x8xf32>
    %c0_84 = arith.constant 0 : index
    %c0_85 = arith.constant 0 : index
    %120 = vector.load %arg11[%c0_84, %c0_85] : memref<16x32xf32, #tpu.memory_space<vmem>>, vector<16x32xf32>
    %cst_86 = arith.constant dense<0.000000e+00> : vector<16x8xf32>
    %121 = tpu.matmul %120, %119, %cst_86 {dimension_numbers = #tpu.dot_dimension_numbers<[1], [0], [0], [1], [0, 0, 1, 1], [], []>} : vector<16x32xf32>, vector<32x8xf32>, vector<16x8xf32> -> vector<16x8xf32>
    %c0_87 = arith.constant 0 : index
    %c0_88 = arith.constant 0 : index
    %122 = vector.load %arg12[%c0_87, %c0_88] : memref<16x1xf32, #tpu.memory_space<vmem>>, vector<16x1xf32>
    %123 = vector.broadcast %122 : vector<16x1xf32> to vector<16x8xf32>
    %124 = arith.addf %121, %123 : vector<16x8xf32>
    %125 = vector.extract_strided_slice %124 {offsets = [0, 0], sizes = [8, 8], strides = [1, 1]} : vector<16x8xf32> to vector<8x8xf32>
    %126 = vector.extract_strided_slice %124 {offsets = [8, 0], sizes = [8, 8], strides = [1, 1]} : vector<16x8xf32> to vector<8x8xf32>
    %127 = math.exp %126 : vector<8x8xf32>
    %128 = arith.mulf %127, %12 : vector<8x8xf32>
    %129 = arith.addf %125, %128 : vector<8x8xf32>
    %130 = vector.broadcast %3 : vector<1x8xf32> to vector<8x8xf32>
    %131 = arith.mulf %129, %130 : vector<8x8xf32>
    %c0_89 = arith.constant 0 : index
    %c0_90 = arith.constant 0 : index
    %c0_91 = arith.constant 0 : index
    %132 = vector.load %arg13[%c0_89, %c0_90, %c0_91] : memref<1x16x8xf32, #tpu.memory_space<vmem>>, vector<1x8x8xf32>
    %133 = vector.shape_cast %132 : vector<1x8x8xf32> to vector<8x8xf32>
    %134 = vector.shape_cast %11 : vector<8x8xf32> to vector<1x8x8xf32>
    tpu.vector_store %arg13[%c0_89, %c0_90, %c0_91], %134 {strides = array<i32>} : memref<1x16x8xf32, #tpu.memory_space<vmem>>, vector<1x8x8xf32>,
    %c0_92 = arith.constant 0 : index
    %c8 = arith.constant 8 : index
    %c0_93 = arith.constant 0 : index
    %135 = vector.load %arg13[%c0_92, %c8, %c0_93] : memref<1x16x8xf32, #tpu.memory_space<vmem>>, vector<1x8x8xf32>
    %136 = vector.shape_cast %135 : vector<1x8x8xf32> to vector<8x8xf32>
    %137 = vector.shape_cast %131 : vector<8x8xf32> to vector<1x8x8xf32>
    tpu.vector_store %arg13[%c0_92, %c8, %c0_93], %137 {strides = array<i32>} : memref<1x16x8xf32, #tpu.memory_space<vmem>>, vector<1x8x8xf32>,
    %138 = vector.broadcast %3 : vector<1x8xf32> to vector<8x8xf32>
    %139 = arith.mulf %126, %138 : vector<8x8xf32>
    %cst_94 = arith.constant dense<0.000000e+00> : vector<8xf32>
    %140 = vector.multi_reduction <add>, %139, %cst_94 [1] : vector<8x8xf32> to vector<8xf32>
    %141 = vector.shape_cast %140 : vector<8xf32> to vector<8x1xf32>
    %cst_95 = arith.constant dense<0.000000e+00> : vector<1xf32>
    %142 = vector.multi_reduction <add>, %141, %cst_95 [0] : vector<8x1xf32> to vector<1xf32>
    %143 = vector.shape_cast %142 : vector<1xf32> to vector<1x1xf32>
    %c0_96 = arith.constant 0 : index
    %c0_97 = arith.constant 0 : index
    %c0_98 = arith.constant 0 : index
    %144 = vector.load %arg14[%c0_96, %c0_97, %c0_98] : memref<1x1x1xf32, #tpu.memory_space<vmem>>, vector<1x1x1xf32>
    %145 = vector.shape_cast %144 : vector<1x1x1xf32> to vector<1x1xf32>
    %146 = vector.shape_cast %143 : vector<1x1xf32> to vector<1x1x1xf32>
    tpu.vector_store %arg14[%c0_96, %c0_97, %c0_98], %146 {strides = array<i32>} : memref<1x1x1xf32, #tpu.memory_space<vmem>>, vector<1x1x1xf32>,
    return
  }
  func.func @transform_0(%arg0: i32) -> (i32, i32, i32) {
    %c0_i32 = arith.constant 0 : i32
    %c0_i32_0 = arith.constant 0 : i32
    %c0_i32_1 = arith.constant 0 : i32
    return %arg0, %c0_i32, %c0_i32_0 : i32, i32, i32
  }
  func.func @transform_1(%arg0: i32) -> (i32, i32, i32) {
    %c0_i32 = arith.constant 0 : i32
    %c0_i32_0 = arith.constant 0 : i32
    %c0_i32_1 = arith.constant 0 : i32
    return %arg0, %c0_i32, %c0_i32_0 : i32, i32, i32
  }
  func.func @transform_2(%arg0: i32) -> (i32, i32) {
    %c0_i32 = arith.constant 0 : i32
    %c0_i32_0 = arith.constant 0 : i32
    %c0_i32_1 = arith.constant 0 : i32
    return %c0_i32, %c0_i32_0 : i32, i32
  }
  func.func @transform_3(%arg0: i32) -> (i32, i32) {
    %c0_i32 = arith.constant 0 : i32
    %c0_i32_0 = arith.constant 0 : i32
    %c0_i32_1 = arith.constant 0 : i32
    return %c0_i32, %c0_i32_0 : i32, i32
  }
  func.func @transform_4(%arg0: i32) -> (i32, i32) {
    %c0_i32 = arith.constant 0 : i32
    %c0_i32_0 = arith.constant 0 : i32
    %c0_i32_1 = arith.constant 0 : i32
    return %c0_i32, %c0_i32_0 : i32, i32
  }
  func.func @transform_5(%arg0: i32) -> (i32, i32) {
    %c0_i32 = arith.constant 0 : i32
    %c0_i32_0 = arith.constant 0 : i32
    %c0_i32_1 = arith.constant 0 : i32
    return %c0_i32, %c0_i32_0 : i32, i32
  }
  func.func @transform_6(%arg0: i32) -> (i32, i32, i32) {
    %c0_i32 = arith.constant 0 : i32
    %c0_i32_0 = arith.constant 0 : i32
    %c0_i32_1 = arith.constant 0 : i32
    %c0_i32_2 = arith.constant 0 : i32
    return %c0_i32, %c0_i32_0, %c0_i32_1 : i32, i32, i32
  }
  func.func @transform_7(%arg0: i32) -> (i32, i32, i32) {
    %c0_i32 = arith.constant 0 : i32
    %c0_i32_0 = arith.constant 0 : i32
    %c0_i32_1 = arith.constant 0 : i32
    %c0_i32_2 = arith.constant 0 : i32
    return %c0_i32, %c0_i32_0, %c0_i32_1 : i32, i32, i32
  }
  func.func @transform_8(%arg0: i32) -> (i32, i32, i32) {
    %c0_i32 = arith.constant 0 : i32
    %c0_i32_0 = arith.constant 0 : i32
    %c0_i32_1 = arith.constant 0 : i32
    %c0_i32_2 = arith.constant 0 : i32
    return %c0_i32, %c0_i32_0, %c0_i32_1 : i32, i32, i32
  }
  func.func @transform_9(%arg0: i32) -> (i32, i32, i32) {
    %c0_i32 = arith.constant 0 : i32
    %c0_i32_0 = arith.constant 0 : i32
    %c0_i32_1 = arith.constant 0 : i32
    %c0_i32_2 = arith.constant 0 : i32
    return %c0_i32, %c0_i32_0, %c0_i32_1 : i32, i32, i32
  }
  func.func @transform_10(%arg0: i32) -> (i32, i32) {
    %c0_i32 = arith.constant 0 : i32
    %c0_i32_0 = arith.constant 0 : i32
    %c0_i32_1 = arith.constant 0 : i32
    return %c0_i32, %c0_i32_0 : i32, i32
  }
  func.func @transform_11(%arg0: i32) -> (i32, i32) {
    %c0_i32 = arith.constant 0 : i32
    %c0_i32_0 = arith.constant 0 : i32
    %c0_i32_1 = arith.constant 0 : i32
    return %c0_i32, %c0_i32_0 : i32, i32
  }
  func.func @transform_12(%arg0: i32) -> (i32, i32, i32) {
    %c0_i32 = arith.constant 0 : i32
    %c0_i32_0 = arith.constant 0 : i32
    %c0_i32_1 = arith.constant 0 : i32
    return %arg0, %c0_i32, %c0_i32_0 : i32, i32, i32
  }
  func.func @transform_13(%arg0: i32) -> (i32, i32, i32) {
    %c0_i32 = arith.constant 0 : i32
    %c0_i32_0 = arith.constant 0 : i32
    %c0_i32_1 = arith.constant 0 : i32
    return %arg0, %c0_i32, %c0_i32_0 : i32, i32, i32
  }
}

</mosaic_0001>

<llo_original>
// kernel: mul.51
$region0: #{mul.51}
  %s0 = inlined_call_operand.vmem [shape: f32[2,8,1,2], index: 0, kind: input, shape index: {}]
  %s1 = inlined_call_operand.vmem [shape: f32[2,16], index: 1, kind: output, shape index: {}]
  $region1: #{mul.51} parent=0
    #allocation0 [shape = 'u8[4096]{0}', space=vmem, size = 0x1000, scoped, tag = 'scoped mem for output reshape']
    %s2 = smov 3
    %v3 = vld [vmem:[%s0] ss:$8 sm:%s2]
    %vm4 = vcmask 15360
    %5 = vst.msk [vmem:[#allocation0] sm:$0x3] %vm4, %v3
    %s6 = scalar_lea.vmem %s0, 7
    %s7 = smov 3
    %v8 = vld [vmem:[%s6] ss:$8 sm:%s7]
    %9 = vrot.lane.b32.xlu0 %v8, 14
    %v10 = vpop.permute.xlu0 %9
    %vm11 = vcmask 130160
    %12 = vst.msk [vmem:[#allocation0] sm:$0x3] %vm11, %v10
    %s13 = scalar_lea.vmem %s0, 6
    %s14 = smov 3
    %v15 = vld [vmem:[%s13] ss:$8 sm:%s14]
    %16 = vrot.lane.b32.xlu0 %v15, 12
    %v17 = vpop.permute.xlu0 %16
    %vm18 = vcmask 113760
    %19 = vst.msk [vmem:[#allocation0] sm:$0x3] %vm18, %v17
    %s20 = scalar_lea.vmem %s0, 5
    %s21 = smov 3
    %v22 = vld [vmem:[%s20] ss:$8 sm:%s21]
    %23 = vrot.lane.b32.xlu0 %v22, 10
    %v24 = vpop.permute.xlu0 %23
    %vm25 = vcmask 97360
    %26 = vst.msk [vmem:[#allocation0] sm:$0x3] %vm25, %v24
    %s27 = scalar_lea.vmem %s0, 4
    %s28 = smov 3
    %v29 = vld [vmem:[%s27] ss:$8 sm:%s28]
    %30 = vrot.lane.b32.xlu0 %v29, 8
    %v31 = vpop.permute.xlu0 %30
    %vm32 = vcmask 80960
    %33 = vst.msk [vmem:[#allocation0] sm:$0x3] %vm32, %v31
    %s34 = scalar_lea.vmem %s0, 3
    %s35 = smov 3
    %v36 = vld [vmem:[%s34] ss:$8 sm:%s35]
    %37 = vrot.lane.b32.xlu0 %v36, 6
    %v38 = vpop.permute.xlu0 %37
    %vm39 = vcmask 64560
    %40 = vst.msk [vmem:[#allocation0] sm:$0x3] %vm39, %v38
    %s41 = scalar_lea.vmem %s0, 2
    %s42 = smov 3
    %v43 = vld [vmem:[%s41] ss:$8 sm:%s42]
    %44 = vrot.lane.b32.xlu0 %v43, 4
    %v45 = vpop.permute.xlu0 %44
    %vm46 = vcmask 48160
    %47 = vst.msk [vmem:[#allocation0] sm:$0x3] %vm46, %v45
    %s48 = scalar_lea.vmem %s0, 1
    %s49 = smov 3
    %v50 = vld [vmem:[%s48] ss:$8 sm:%s49]
    %51 = vrot.lane.b32.xlu0 %v50, 2
    %v52 = vpop.permute.xlu0 %51
    %vm53 = vcmask 31760
    %54 = vst.msk [vmem:[#allocation0] sm:$0x3] %vm53, %v52
    %s56 = ssub.s32 4, 1
    %v57 = vld [vmem:[#allocation0] sm:%s56]
    %s59 = ssub.s32 4, 1
    %60 = vst [vmem:[%s1] sm:%s59] %v57

// kernel: pallas_forward.2
$region0: #{pallas_forward.2}
  #allocation0 [shape = 'u32[]', space=smem, size = 0x4, offset = 0x4, fixed_abs, tag = 'smem constant byte address 0x4 - core index']
  #allocation1 [shape = 'u32[72,128]{1,0:T(1,128)}', space=vmem, size = 0x9000, scoped, tag = 'internal scratch']
  #allocation2 [shape = 'f32[32,8]{1,0:T(8,128)}', space=vmem, size = 0x4000, scoped, tag = 'scratch operand']
  #allocation3 [shape = 'f32[32,8]{1,0:T(8,128)}', space=vmem, size = 0x4000, scoped, tag = 'scratch operand']
  %s0 = inlined_call_operand.vmem [shape: f32[2,16,8], index: 0, kind: input, shape index: {}, may-alias: {0,12}]
  %s1 = inlined_call_operand.vmem [shape: f32[2,1,8], index: 1, kind: input, shape index: {}]
  %s2 = inlined_call_operand.vmem [shape: f32[16,16], index: 2, kind: input, shape index: {}]
  %s3 = inlined_call_operand.vmem [shape: f32[16,1], index: 3, kind: input, shape index: {}]
  %s4 = inlined_call_operand.vmem [shape: f32[32,8], index: 4, kind: input, shape index: {}]
  %s5 = inlined_call_operand.vmem [shape: f32[32,1], index: 5, kind: input, shape index: {}]
  %s6 = inlined_call_operand.vmem [shape: f32[6,64,32], index: 6, kind: input, shape index: {}]
  %s7 = inlined_call_operand.vmem [shape: f32[2,64,1], index: 7, kind: input, shape index: {}]
  %s8 = inlined_call_operand.vmem [shape: f32[2,64,32], index: 8, kind: input, shape index: {}]
  %s9 = inlined_call_operand.vmem [shape: f32[2,64,1], index: 9, kind: input, shape index: {}]
  %s10 = inlined_call_operand.vmem [shape: f32[16,32], index: 10, kind: input, shape index: {}]
  %s11 = inlined_call_operand.vmem [shape: f32[16,1], index: 11, kind: input, shape index: {}]
  %s12 = inlined_call_operand.vmem [shape: f32[2,16,8], index: 12, kind: output, shape index: {0}, may-alias: {0,12}]
  %s13 = inlined_call_operand.vmem [shape: f32[2,1,1], index: 13, kind: output, shape index: {1}]
  %14 = xla_tuple %s12, %s13
  %s15 = sld [smem:[#allocation0]]
  $region89: #{pallas_forward.2} parent=0
    _
  %s17 = ssub.s32 1, %s15
  %s18 = scalar_select 0, %s17, %s15
  loop: start=0, step=1, limit=4
  $region2: #{pallas_forward.2} parent=0 // loop_pre_header
    _
  $region3: #{pallas_forward.2} parent=0 // loop_header
    %s20 = sphi 0, %s24
    %p21 = scmp.ge.s32.totalorder %s20, 4
    %s30 = sphi 0, %s32
    %s33 = sphi 0, %s30
    %s34 = sphi 0, %s33
    %s50 = sphi 0, %s34
    %s56 = sphi 0, %s58
    %s59 = sphi 0, %s56
    %s60 = sphi 0, %s59
    %s76 = sphi 0, %s60
    %s80 = sphi 0, %s80
    %s82 = sphi 0, %s80
    %s83 = sphi 0, %s82
    %s97 = sphi 0, %s83
    %s101 = sphi 0, %s101
    %s103 = sphi 0, %s101
    %s104 = sphi 0, %s103
    %s118 = sphi 0, %s104
    %s122 = sphi 0, %s122
    %s124 = sphi 0, %s122
    %s125 = sphi 0, %s124
    %s139 = sphi 0, %s125
    %s143 = sphi 0, %s143
    %s145 = sphi 0, %s143
    %s146 = sphi 0, %s145
    %s160 = sphi 0, %s146
    %s164 = sphi 0, %s164
    %s166 = sphi 0, %s164
    %s167 = sphi 0, %s166
    %s181 = sphi 0, %s167
    %s185 = sphi 0, %s185
    %s187 = sphi 0, %s185
    %s188 = sphi 0, %s187
    %s202 = sphi 0, %s188
    %s206 = sphi 0, %s206
    %s208 = sphi 0, %s206
    %s209 = sphi 0, %s208
    %s223 = sphi 0, %s209
    %s227 = sphi 0, %s227
    %s229 = sphi 0, %s227
    %s230 = sphi 0, %s229
    %s244 = sphi 0, %s230
    %s248 = sphi 0, %s248
    %s250 = sphi 0, %s248
    %s251 = sphi 0, %s250
    %s265 = sphi 0, %s251
    %s269 = sphi 0, %s269
    %s271 = sphi 0, %s269
    %s272 = sphi 0, %s271
    %s286 = sphi 0, %s272
    %s292 = sphi 0, %s294
    %s295 = sphi 0, %s292
    %s296 = sphi 0, %s295
    %s312 = sphi 0, %s296
    %s318 = sphi 0, %s320
    %s321 = sphi 0, %s318
    %s322 = sphi 0, %s321
    %s338 = sphi 0, %s322
  $region4: #{pallas_forward.2} parent=0 // loop_header_branch
    %23 = sbr.rel (%p21) target = $region8
  $region5: #{pallas_forward.2} parent=0 // loop_body
    %s25 = ssub.s32 %s20, 1
    %s26 = ssub.s32 %s20, 2
    %s27 = sadd.s32 %s20, 1
    %s28 = ssub.s32 %s20, %s27
    %p29 = scmp.eq.s32.totalorder %s28, 0
    %s31 = sadd.s32 %s30, 1
    %s32 = scalar_select %p29, %s30, %s31
    %p35 = pneg %p29
    %p36 = scmp.eq.s32.totalorder %s20, 1
    %p37 = por %p35, %p36
    %p38 = scmp.ne.s32.totalorder %s30, %s33
    %p39 = scmp.eq.s32.totalorder %s20, 0
    %p40 = por %p38, %p39
    %p41 = scmp.ne.s32.totalorder %s30, %s33
    %p42 = scmp.eq.s32.totalorder %s25, 1
    %p43 = por %p41, %p42
    %p44 = scmp.ne.s32.totalorder %s33, %s34
    %p45 = scmp.eq.s32.totalorder %s25, 0
    %p46 = por %p44, %p45
    %p47 = scmp.ne.s32.totalorder %s33, %s34
    %p48 = scmp.eq.s32.totalorder %s26, 1
    %p49 = por %p47, %p48
    %p51 = scmp.ne.s32.totalorder %s34, %s50
    %p52 = scmp.eq.s32.totalorder %s26, 0
    %p53 = por %p51, %p52
    %s54 = ssub.s32 %s20, %s27
    %p55 = scmp.eq.s32.totalorder %s54, 0
    %s57 = sadd.s32 %s56, 1
    %s58 = scalar_select %p55, %s56, %s57
    %p61 = pneg %p55
    %p62 = scmp.eq.s32.totalorder %s20, 1
    %p63 = por %p61, %p62
    %p64 = scmp.ne.s32.totalorder %s56, %s59
    %p65 = scmp.eq.s32.totalorder %s20, 0
    %p66 = por %p64, %p65
    %p67 = scmp.ne.s32.totalorder %s56, %s59
    %p68 = scmp.eq.s32.totalorder %s25, 1
    %p69 = por %p67, %p68
    %p70 = scmp.ne.s32.totalorder %s59, %s60
    %p71 = scmp.eq.s32.totalorder %s25, 0
    %p72 = por %p70, %p71
    %p73 = scmp.ne.s32.totalorder %s59, %s60
    %p74 = scmp.eq.s32.totalorder %s26, 1
    %p75 = por %p73, %p74
    %p77 = scmp.ne.s32.totalorder %s60, %s76
    %p78 = scmp.eq.s32.totalorder %s26, 0
    %p79 = por %p77, %p78
    %s81 = sadd.s32 %s80, 1
    %p84 = scmp.eq.s32.totalorder %s20, 1
    %p85 = scmp.ne.s32.totalorder %s80, %s82
    %p86 = scmp.eq.s32.totalorder %s20, 0
    %p87 = por %p85, %p86
    %p88 = scmp.ne.s32.totalorder %s80, %s82
    %p89 = scmp.eq.s32.totalorder %s25, 1
    %p90 = por %p88, %p89
    %p91 = scmp.ne.s32.totalorder %s82, %s83
    %p92 = scmp.eq.s32.totalorder %s25, 0
    %p93 = por %p91, %p92
    %p94 = scmp.ne.s32.totalorder %s82, %s83
    %p95 = scmp.eq.s32.totalorder %s26, 1
    %p96 = por %p94, %p95
    %p98 = scmp.ne.s32.totalorder %s83, %s97
    %p99 = scmp.eq.s32.totalorder %s26, 0
    %p100 = por %p98, %p99
    %s102 = sadd.s32 %s101, 1
    %p105 = scmp.eq.s32.totalorder %s20, 1
    %p106 = scmp.ne.s32.totalorder %s101, %s103
    %p107 = scmp.eq.s32.totalorder %s20, 0
    %p108 = por %p106, %p107
    %p109 = scmp.ne.s32.totalorder %s101, %s103
    %p110 = scmp.eq.s32.totalorder %s25, 1
    %p111 = por %p109, %p110
    %p112 = scmp.ne.s32.totalorder %s103, %s104
    %p113 = scmp.eq.s32.totalorder %s25, 0
    %p114 = por %p112, %p113
    %p115 = scmp.ne.s32.totalorder %s103, %s104
    %p116 = scmp.eq.s32.totalorder %s26, 1
    %p117 = por %p115, %p116
    %p119 = scmp.ne.s32.totalorder %s104, %s118
    %p120 = scmp.eq.s32.totalorder %s26, 0
    %p121 = por %p119, %p120
    %s123 = sadd.s32 %s122, 1
    %p126 = scmp.eq.s32.totalorder %s20, 1
    %p127 = scmp.ne.s32.totalorder %s122, %s124
    %p128 = scmp.eq.s32.totalorder %s20, 0
    %p129 = por %p127, %p128
    %p130 = scmp.ne.s32.totalorder %s122, %s124
    %p131 = scmp.eq.s32.totalorder %s25, 1
    %p132 = por %p130, %p131
    %p133 = scmp.ne.s32.totalorder %s124, %s125
    %p134 = scmp.eq.s32.totalorder %s25, 0
    %p135 = por %p133, %p134
    %p136 = scmp.ne.s32.totalorder %s124, %s125
    %p137 = scmp.eq.s32.totalorder %s26, 1
    %p138 = por %p136, %p137
    %p140 = scmp.ne.s32.totalorder %s125, %s139
    %p141 = scmp.eq.s32.totalorder %s26, 0
    %p142 = por %p140, %p141
    %s144 = sadd.s32 %s143, 1
    %p147 = scmp.eq.s32.totalorder %s20, 1
    %p148 = scmp.ne.s32.totalorder %s143, %s145
    %p149 = scmp.eq.s32.totalorder %s20, 0
    %p150 = por %p148, %p149
    %p151 = scmp.ne.s32.totalorder %s143, %s145
    %p152 = scmp.eq.s32.totalorder %s25, 1
    %p153 = por %p151, %p152
    %p154 = scmp.ne.s32.totalorder %s145, %s146
    %p155 = scmp.eq.s32.totalorder %s25, 0
    %p156 = por %p154, %p155
    %p157 = scmp.ne.s32.totalorder %s145, %s146
    %p158 = scmp.eq.s32.totalorder %s26, 1
    %p159 = por %p157, %p158
    %p161 = scmp.ne.s32.totalorder %s146, %s160
    %p162 = scmp.eq.s32.totalorder %s26, 0
    %p163 = por %p161, %p162
    %s165 = sadd.s32 %s164, 1
    %p168 = scmp.eq.s32.totalorder %s20, 1
    %p169 = scmp.ne.s32.totalorder %s164, %s166
    %p170 = scmp.eq.s32.totalorder %s20, 0
    %p171 = por %p169, %p170
    %p172 = scmp.ne.s32.totalorder %s164, %s166
    %p173 = scmp.eq.s32.totalorder %s25, 1
    %p174 = por %p172, %p173
    %p175 = scmp.ne.s32.totalorder %s166, %s167
    %p176 = scmp.eq.s32.totalorder %s25, 0
    %p177 = por %p175, %p176
    %p178 = scmp.ne.s32.totalorder %s166, %s167
    %p179 = scmp.eq.s32.totalorder %s26, 1
    %p180 = por %p178, %p179
    %p182 = scmp.ne.s32.totalorder %s167, %s181
    %p183 = scmp.eq.s32.totalorder %s26, 0
    %p184 = por %p182, %p183
    %s186 = sadd.s32 %s185, 1
    %p189 = scmp.eq.s32.totalorder %s20, 1
    %p190 = scmp.ne.s32.totalorder %s185, %s187
    %p191 = scmp.eq.s32.totalorder %s20, 0
    %p192 = por %p190, %p191
    %p193 = scmp.ne.s32.totalorder %s185, %s187
    %p194 = scmp.eq.s32.totalorder %s25, 1
    %p195 = por %p193, %p194
    %p196 = scmp.ne.s32.totalorder %s187, %s188
    %p197 = scmp.eq.s32.totalorder %s25, 0
    %p198 = por %p196, %p197
    %p199 = scmp.ne.s32.totalorder %s187, %s188
    %p200 = scmp.eq.s32.totalorder %s26, 1
    %p201 = por %p199, %p200
    %p203 = scmp.ne.s32.totalorder %s188, %s202
    %p204 = scmp.eq.s32.totalorder %s26, 0
    %p205 = por %p203, %p204
    %s207 = sadd.s32 %s206, 1
    %p210 = scmp.eq.s32.totalorder %s20, 1
    %p211 = scmp.ne.s32.totalorder %s206, %s208
    %p212 = scmp.eq.s32.totalorder %s20, 0
    %p213 = por %p211, %p212
    %p214 = scmp.ne.s32.totalorder %s206, %s208
    %p215 = scmp.eq.s32.totalorder %s25, 1
    %p216 = por %p214, %p215
    %p217 = scmp.ne.s32.totalorder %s208, %s209
    %p218 = scmp.eq.s32.totalorder %s25, 0
    %p219 = por %p217, %p218
    %p220 = scmp.ne.s32.totalorder %s208, %s209
    %p221 = scmp.eq.s32.totalorder %s26, 1
    %p222 = por %p220, %p221
    %p224 = scmp.ne.s32.totalorder %s209, %s223
    %p225 = scmp.eq.s32.totalorder %s26, 0
    %p226 = por %p224, %p225
    %s228 = sadd.s32 %s227, 1
    %p231 = scmp.eq.s32.totalorder %s20, 1
    %p232 = scmp.ne.s32.totalorder %s227, %s229
    %p233 = scmp.eq.s32.totalorder %s20, 0
    %p234 = por %p232, %p233
    %p235 = scmp.ne.s32.totalorder %s227, %s229
    %p236 = scmp.eq.s32.totalorder %s25, 1
    %p237 = por %p235, %p236
    %p238 = scmp.ne.s32.totalorder %s229, %s230
    %p239 = scmp.eq.s32.totalorder %s25, 0
    %p240 = por %p238, %p239
    %p241 = scmp.ne.s32.totalorder %s229, %s230
    %p242 = scmp.eq.s32.totalorder %s26, 1
    %p243 = por %p241, %p242
    %p245 = scmp.ne.s32.totalorder %s230, %s244
    %p246 = scmp.eq.s32.totalorder %s26, 0
    %p247 = por %p245, %p246
    %s249 = sadd.s32 %s248, 1
    %p252 = scmp.eq.s32.totalorder %s20, 1
    %p253 = scmp.ne.s32.totalorder %s248, %s250
    %p254 = scmp.eq.s32.totalorder %s20, 0
    %p255 = por %p253, %p254
    %p256 = scmp.ne.s32.totalorder %s248, %s250
    %p257 = scmp.eq.s32.totalorder %s25, 1
    %p258 = por %p256, %p257
    %p259 = scmp.ne.s32.totalorder %s250, %s251
    %p260 = scmp.eq.s32.totalorder %s25, 0
    %p261 = por %p259, %p260
    %p262 = scmp.ne.s32.totalorder %s250, %s251
    %p263 = scmp.eq.s32.totalorder %s26, 1
    %p264 = por %p262, %p263
    %p266 = scmp.ne.s32.totalorder %s251, %s265
    %p267 = scmp.eq.s32.totalorder %s26, 0
    %p268 = por %p266, %p267
    %s270 = sadd.s32 %s269, 1
    %p273 = scmp.eq.s32.totalorder %s20, 1
    %p274 = scmp.ne.s32.totalorder %s269, %s271
    %p275 = scmp.eq.s32.totalorder %s20, 0
    %p276 = por %p274, %p275
    %p277 = scmp.ne.s32.totalorder %s269, %s271
    %p278 = scmp.eq.s32.totalorder %s25, 1
    %p279 = por %p277, %p278
    %p280 = scmp.ne.s32.totalorder %s271, %s272
    %p281 = scmp.eq.s32.totalorder %s25, 0
    %p282 = por %p280, %p281
    %p283 = scmp.ne.s32.totalorder %s271, %s272
    %p284 = scmp.eq.s32.totalorder %s26, 1
    %p285 = por %p283, %p284
    %p287 = scmp.ne.s32.totalorder %s272, %s286
    %p288 = scmp.eq.s32.totalorder %s26, 0
    %p289 = por %p287, %p288
    %s290 = ssub.s32 %s20, %s27
    %p291 = scmp.eq.s32.totalorder %s290, 0
    %s293 = sadd.s32 %s292, 1
    %s294 = scalar_select %p291, %s292, %s293
    %p297 = pneg %p291
    %p298 = scmp.eq.s32.totalorder %s20, 1
    %p299 = por %p297, %p298
    %p300 = scmp.ne.s32.totalorder %s292, %s295
    %p301 = scmp.eq.s32.totalorder %s20, 0
    %p302 = por %p300, %p301
    %p303 = scmp.ne.s32.totalorder %s292, %s295
    %p304 = scmp.eq.s32.totalorder %s25, 1
    %p305 = por %p303, %p304
    %p306 = scmp.ne.s32.totalorder %s295, %s296
    %p307 = scmp.eq.s32.totalorder %s25, 0
    %p308 = por %p306, %p307
    %p309 = scmp.ne.s32.totalorder %s295, %s296
    %p310 = scmp.eq.s32.totalorder %s26, 1
    %p311 = por %p309, %p310
    %p313 = scmp.ne.s32.totalorder %s296, %s312
    %p314 = scmp.eq.s32.totalorder %s26, 0
    %p315 = por %p313, %p314
    %s316 = ssub.s32 %s20, %s27
    %p317 = scmp.eq.s32.totalorder %s316, 0
    %s319 = sadd.s32 %s318, 1
    %s320 = scalar_select %p317, %s318, %s319
    %p323 = pneg %p317
    %p324 = scmp.eq.s32.totalorder %s20, 1
    %p325 = por %p323, %p324
    %p326 = scmp.ne.s32.totalorder %s318, %s321
    %p327 = scmp.eq.s32.totalorder %s20, 0
    %p328 = por %p326, %p327
    %p329 = scmp.ne.s32.totalorder %s318, %s321
    %p330 = scmp.eq.s32.totalorder %s25, 1
    %p331 = por %p329, %p330
    %p332 = scmp.ne.s32.totalorder %s321, %s322
    %p333 = scmp.eq.s32.totalorder %s25, 0
    %p334 = por %p332, %p333
    %p335 = scmp.ne.s32.totalorder %s321, %s322
    %p336 = scmp.eq.s32.totalorder %s26, 1
    %p337 = por %p335, %p336
    %p339 = scmp.ne.s32.totalorder %s322, %s338
    %p340 = scmp.eq.s32.totalorder %s26, 0
    %p341 = por %p339, %p340
    %p342 = scmp.le.s32.totalorder 1, %s20
    %p343 = scmp.lt.s32.totalorder %s20, 3
    %p344 = pnand %p342, %p343
    %p345 = pneg %p344
    // Predicated region
    $region9: #{pallas_forward.2} parent=5 // pred_check
      _
    $region10: #{pallas_forward.2} parent=5 // pred_check_branch
      %347 = sbr.rel (%p344) target = $region12
    $region11: #{pallas_forward.2} parent=5 // pred_region
      %s348 = ssub.s32 %s20, 1
      // Predicated region
      $region13: #{pallas_forward.2} parent=11 // pred_check
        %p349 = pneg %p93
      $region14: #{pallas_forward.2} parent=11 // pred_check_branch
        %351 = sbr.rel (%p349) target = $region16
      $region15: #{pallas_forward.2} parent=11 // pred_region
        _
      $region16: #{pallas_forward.2} parent=11 // pred_fallthru
        _
      // Predicated region
      $region17: #{pallas_forward.2} parent=11 // pred_check
        %p352 = pneg %p114
      $region18: #{pallas_forward.2} parent=11 // pred_check_branch
        %354 = sbr.rel (%p352) target = $region20
      $region19: #{pallas_forward.2} parent=11 // pred_region
        _
      $region20: #{pallas_forward.2} parent=11 // pred_fallthru
        _
      // Predicated region
      $region21: #{pallas_forward.2} parent=11 // pred_check
        %p355 = pneg %p135
      $region22: #{pallas_forward.2} parent=11 // pred_check_branch
        %357 = sbr.rel (%p355) target = $region24
      $region23: #{pallas_forward.2} parent=11 // pred_region
        _
      $region24: #{pallas_forward.2} parent=11 // pred_fallthru
        _
      // Predicated region
      $region25: #{pallas_forward.2} parent=11 // pred_check
        %p358 = pneg %p156
      $region26: #{pallas_forward.2} parent=11 // pred_check_branch
        %360 = sbr.rel (%p358) target = $region28
      $region27: #{pallas_forward.2} parent=11 // pred_region
        _
      $region28: #{pallas_forward.2} parent=11 // pred_fallthru
        _
      // Predicated region
      $region29: #{pallas_forward.2} parent=11 // pred_check
        %p361 = pneg %p177
      $region30: #{pallas_forward.2} parent=11 // pred_check_branch
        %363 = sbr.rel (%p361) target = $region32
      $region31: #{pallas_forward.2} parent=11 // pred_region
        _
      $region32: #{pallas_forward.2} parent=11 // pred_fallthru
        _
      // Predicated region
      $region33: #{pallas_forward.2} parent=11 // pred_check
        %p364 = pneg %p198
      $region34: #{pallas_forward.2} parent=11 // pred_check_branch
        %366 = sbr.rel (%p364) target = $region36
      $region35: #{pallas_forward.2} parent=11 // pred_region
        _
      $region36: #{pallas_forward.2} parent=11 // pred_fallthru
        _
      // Predicated region
      $region37: #{pallas_forward.2} parent=11 // pred_check
        %p367 = pneg %p219
      $region38: #{pallas_forward.2} parent=11 // pred_check_branch
        %369 = sbr.rel (%p367) target = $region40
      $region39: #{pallas_forward.2} parent=11 // pred_region
        _
      $region40: #{pallas_forward.2} parent=11 // pred_fallthru
        _
      // Predicated region
      $region41: #{pallas_forward.2} parent=11 // pred_check
        %p370 = pneg %p240
      $region42: #{pallas_forward.2} parent=11 // pred_check_branch
        %372 = sbr.rel (%p370) target = $region44
      $region43: #{pallas_forward.2} parent=11 // pred_region
        _
      $region44: #{pallas_forward.2} parent=11 // pred_fallthru
        _
      // Predicated region
      $region45: #{pallas_forward.2} parent=11 // pred_check
        %p373 = pneg %p261
      $region46: #{pallas_forward.2} parent=11 // pred_check_branch
        %375 = sbr.rel (%p373) target = $region48
      $region47: #{pallas_forward.2} parent=11 // pred_region
        _
      $region48: #{pallas_forward.2} parent=11 // pred_fallthru
        _
      // Predicated region
      $region49: #{pallas_forward.2} parent=11 // pred_check
        %p376 = pneg %p282
      $region50: #{pallas_forward.2} parent=11 // pred_check_branch
        %378 = sbr.rel (%p376) target = $region52
      $region51: #{pallas_forward.2} parent=11 // pred_region
        _
      $region52: #{pallas_forward.2} parent=11 // pred_fallthru
        _
    $region12: #{pallas_forward.2} parent=5 // pred_fallthru
      _
    %p379 = scmp.lt.s32.totalorder %s20, 2
    // Predicated region
    $region53: #{pallas_forward.2} parent=5 // pred_check
      %p380 = pneg %p379
    $region54: #{pallas_forward.2} parent=5 // pred_check_branch
      %382 = sbr.rel (%p380) target = $region56
    $region55: #{pallas_forward.2} parent=5 // pred_region
      // Predicated region
      $region57: #{pallas_forward.2} parent=55 // pred_check
        %p383 = pneg %p40
      $region58: #{pallas_forward.2} parent=55 // pred_check_branch
        %385 = sbr.rel (%p383) target = $region60
      $region59: #{pallas_forward.2} parent=55 // pred_region
        %p386 = scmp.lt.s32.totalorder %s20, 1
        %s387 = scalar_select %p386, %s20, 1
        %s388 = smul.addr %s387, 2
        %s389 = smul.addr %s388, 8
        %s390 = scalar_lea.vmem %s0, %s389
      $region60: #{pallas_forward.2} parent=55 // pred_fallthru
        _
      // Predicated region
      $region61: #{pallas_forward.2} parent=55 // pred_check
        %p391 = pneg %p66
      $region62: #{pallas_forward.2} parent=55 // pred_check_branch
        %393 = sbr.rel (%p391) target = $region64
      $region63: #{pallas_forward.2} parent=55 // pred_region
        %p394 = scmp.lt.s32.totalorder %s20, 1
        %s395 = scalar_select %p394, %s20, 1
        %s396 = scalar_lea.vmem %s1, %s395
      $region64: #{pallas_forward.2} parent=55 // pred_fallthru
        _
    $region56: #{pallas_forward.2} parent=5 // pred_fallthru
      _
    %p397 = scmp.le.s32.totalorder 1, %s20
    %p398 = scmp.lt.s32.totalorder %s20, 3
    %p399 = pnand %p397, %p398
    %p400 = pneg %p399
    // Predicated region
    $region65: #{pallas_forward.2} parent=5 // pred_check
      _
    $region66: #{pallas_forward.2} parent=5 // pred_check_branch
      %402 = sbr.rel (%p399) target = $region68
    $region67: #{pallas_forward.2} parent=5 // pred_region
      %s403 = ssub.s32 %s20, 1
      %p404 = scmp.lt.s32.totalorder %s25, 1
      %s405 = scalar_select %p404, %s25, 1
      %s406 = smul.addr %s405, 2
      %s407 = smul.addr %s406, 8
      %s408 = scalar_lea.vmem %s0, %s407
      %p409 = pneg %p46
      %p410 = pneg %p43
      %p411 = scmp.lt.s32.totalorder %s25, 1
      %s412 = scalar_select %p411, %s25, 1
      %s413 = scalar_lea.vmem %s1, %s412
      %p414 = pneg %p72
      %p415 = pneg %p69
      %p416 = pneg %p93
      %p417 = pneg %p90
      %p418 = pneg %p114
      %p419 = pneg %p111
      %p420 = pneg %p135
      %p421 = pneg %p132
      %p422 = pneg %p156
      %p423 = pneg %p153
      %p424 = pneg %p177
      %p425 = pneg %p174
      %p426 = pneg %p198
      %p427 = pneg %p195
      %p428 = pneg %p219
      %p429 = pneg %p216
      %p430 = pneg %p240
      %p431 = pneg %p237
      %p432 = pneg %p261
      %p433 = pneg %p258
      %p434 = pneg %p282
      %p435 = pneg %p279
      %p436 = pneg %p308
      %p437 = pneg %p305
      %p438 = scmp.lt.s32.totalorder %s25, 1
      %s439 = scalar_select %p438, %s25, 1
      %s440 = smul.addr %s439, 2
      %s441 = smul.addr %s440, 8
      %s442 = scalar_lea.vmem %s12, %s441
      %p443 = pneg %p334
      %p444 = pneg %p331
      %p445 = scmp.lt.s32.totalorder %s25, 1
      %s446 = scalar_select %p445, %s25, 1
      %s447 = scalar_lea.vmem %s13, %s446
      %p448 = scmp.lt.s32.totalorder %s25, 1
      %s449 = scalar_select %p448, %s25, 1
      %s450 = smul.addr %s449, 2
      %s451 = smul.addr %s450, 8
      %s452 = scalar_lea.vmem %s0, %s451
      %p453 = scmp.lt.s32.totalorder %s25, 1
      %s454 = scalar_select %p453, %s25, 1
      %s455 = scalar_lea.vmem %s1, %s454
      %p456 = scmp.lt.s32.totalorder %s25, 1
      %s457 = scalar_select %p456, %s25, 1
      %s458 = smul.addr %s457, 2
      %s459 = smul.addr %s458, 8
      %s460 = scalar_lea.vmem %s12, %s459
      %p461 = scmp.lt.s32.totalorder %s25, 1
      %s462 = scalar_select %p461, %s25, 1
      %s463 = scalar_lea.vmem %s13, %s462
      %v464 = vld [vmem:[%s452] sm:$0xff]
      %v465 = vld [vmem:[%s452 + $0x8] sm:$0xff]
      %v466 = vld [vmem:[%s455] sm:$0x1]
      %v467 = vld [vmem:[%s2] sm:$0xff]
      %v468 = vld [vmem:[%s2 + $0x8] sm:$0xff]
      %v469 = vld [vmem:[%s3] sm:$0xff]
      %v470 = vld [vmem:[%s3 + $0x8] sm:$0xff]
      %472 = vset.pattern.permute.xlu0 0
      %473 = vperm.xlu0 %472, %v469
      %v474 = vpop.permute.xlu0 %473
      %477 = vset.pattern.permute.xlu0 0
      %478 = vperm.xlu0 %477, %v470
      %v479 = vpop.permute.xlu0 %478
      %vm481 = vcmask 130048
      %v483 = vsel %vm481, %v467, 0
      %v486 = vsel %vm481, %v468, 0
      %488 = vmatpush.msra.mxu0 0.0
      %489 = vmatpush.msra.mxu0 0.0
      %490 = vmatpush.msra.mxu0 0.0
      %491 = vmatpush.msra.mxu0 0.0
      %492 = vmatpush.msra.mxu0 0.0
      %493 = vmatpush.msra.mxu0 0.0
      %494 = vmatpush.msra.mxu0 0.0
      %495 = vmatpush.msra.mxu0 0.0
      %496 = vmatpush.msra.mxu0 0.0
      %497 = vmatpush.msra.mxu0 0.0
      %498 = vmatpush.msra.mxu0 0.0
      %499 = vmatpush.msra.mxu0 0.0
      %500 = vmatpush.msra.mxu0 0.0
      %501 = vmatpush.msra.mxu0 0.0
      %502 = vmatpush.msra.mxu0 %v465
      %503 = vmatpush.msra.mxu0 %v464
      %504 = vmatmul.f32.gmra.mxu0 %v483
      %v505 = vpop.f32.mrf.mxu0
      %v506 = vadd.f32 %v474, %v505
      %507 = vmatmul.f32.gmra.mxu0 %v486
      %v508 = vpop.f32.mrf.mxu0
      %v509 = vadd.f32 %v479, %v508
      %510 = vdwg.mxu0
      %v512 = vperm.slane %v466, 0
      %v514 = vmul.f32 %v506, %v512
      %v515 = vmul.f32 %v509, %v512
      %v516 = vld [vmem:[%s4] sm:$0xff]
      %v517 = vld [vmem:[%s4 + $0x8] sm:$0xff]
      %v518 = vld [vmem:[%s4 + $0x10] sm:$0xff]
      %v519 = vld [vmem:[%s4 + $0x18] sm:$0xff]
      %v520 = vld [vmem:[%s5] sm:$0xff]
      %v521 = vld [vmem:[%s5 + $0x8] sm:$0xff]
      %v522 = vld [vmem:[%s5 + $0x10] sm:$0xff]
      %v523 = vld [vmem:[%s5 + $0x18] sm:$0xff]
      %525 = vset.pattern.permute.xlu0 0
      %526 = vperm.xlu0 %525, %v520
      %v527 = vpop.permute.xlu0 %526
      %530 = vset.pattern.permute.xlu0 0
      %531 = vperm.xlu0 %530, %v521
      %v532 = vpop.permute.xlu0 %531
      %535 = vset.pattern.permute.xlu0 0
      %536 = vperm.xlu0 %535, %v522
      %v537 = vpop.permute.xlu0 %536
      %540 = vset.pattern.permute.xlu0 0
      %541 = vperm.xlu0 %540, %v523
      %v542 = vpop.permute.xlu0 %541
      %vm544 = vcmask 64512
      %v546 = vsel %vm544, %v516, 0
      %v549 = vsel %vm544, %v517, 0
      %v552 = vsel %vm544, %v518, 0
      %v555 = vsel %vm544, %v519, 0
      %557 = vmatpush.msra.mxu0 0.0
      %558 = vmatpush.msra.mxu0 0.0
      %559 = vmatpush.msra.mxu0 0.0
      %560 = vmatpush.msra.mxu0 0.0
      %561 = vmatpush.msra.mxu0 0.0
      %562 = vmatpush.msra.mxu0 0.0
      %563 = vmatpush.msra.mxu0 0.0
      %564 = vmatpush.msra.mxu0 0.0
      %565 = vmatpush.msra.mxu0 0.0
      %566 = vmatpush.msra.mxu0 0.0
      %567 = vmatpush.msra.mxu0 0.0
      %568 = vmatpush.msra.mxu0 0.0
      %569 = vmatpush.msra.mxu0 0.0
      %570 = vmatpush.msra.mxu0 0.0
      %571 = vmatpush.msra.mxu0 0.0
      %572 = vmatpush.msra.mxu0 %v514
      %573 = vmatmul.f32.gmra.mxu0 %v546
      %v574 = vpop.f32.mrf.mxu0
      %v575 = vadd.f32 %v527, %v574
      %576 = vmatmul.f32.gmra.mxu0 %v549
      %v577 = vpop.f32.mrf.mxu0
      %v578 = vadd.f32 %v532, %v577
      %579 = vmatmul.f32.gmra.mxu0 %v552
      %v580 = vpop.f32.mrf.mxu0
      %v581 = vadd.f32 %v537, %v580
      %582 = vmatmul.f32.gmra.mxu0 %v555
      %v583 = vpop.f32.mrf.mxu0
      %v584 = vadd.f32 %v542, %v583
      %585 = vdwg.mxu0
      %v586 = vmul.f32 %v575, %v512
      %v587 = vmul.f32 %v578, %v512
      %v588 = vmul.f32 %v581, %v512
      %v589 = vmul.f32 %v584, %v512
      %590 = vst.msk [vmem:[#allocation2] sm:$0xff] %vm544, %v586
      %591 = vst.msk [vmem:[#allocation2 + $0x8] sm:$0xff] %vm544, %v587
      %592 = vst.msk [vmem:[#allocation2 + $0x10] sm:$0xff] %vm544, %v588
      %593 = vst.msk [vmem:[#allocation2 + $0x18] sm:$0xff] %vm544, %v589
      %594 = vst.msk [vmem:[#allocation3] sm:$0xff] %vm544, 0.0
      %595 = vst.msk [vmem:[#allocation3 + $0x8] sm:$0xff] %vm544, 0.0
      %596 = vst.msk [vmem:[#allocation3 + $0x10] sm:$0xff] %vm544, 0.0
      %597 = vst.msk [vmem:[#allocation3 + $0x18] sm:$0xff] %vm544, 0.0
      %v598 = vld [vmem:[#allocation2] sm:$0xff]
      %v599 = vld [vmem:[#allocation2 + $0x8] sm:$0xff]
      %v600 = vld [vmem:[#allocation2 + $0x10] sm:$0xff]
      %v601 = vld [vmem:[#allocation2 + $0x18] sm:$0xff]
      %606 = vrot.lane.b32.xlu0 %v598, 1
      %v607 = vpop.permute.xlu0 %606
      %608 = vrot.lane.b32.xlu0 %v599, 1
      %v609 = vpop.permute.xlu0 %608
      %610 = vrot.lane.b32.xlu0 %v600, 1
      %v611 = vpop.permute.xlu0 %610
      %612 = vrot.lane.b32.xlu0 %v601, 1
      %v613 = vpop.permute.xlu0 %612
      %vm618 = vcmask 7168
      %v619 = vsel %vm618, 0.0, %v607
      %v620 = vsel %vm618, 0.0, %v609
      %v621 = vsel %vm618, 0.0, %v611
      %v622 = vsel %vm618, 0.0, %v613
      %v623 = vld [vmem:[%s6] sm:$0xff]
      %v624 = vld [vmem:[%s6 + $0x8] sm:$0xff]
      %v625 = vld [vmem:[%s6 + $0x10] sm:$0xff]
      %v626 = vld [vmem:[%s6 + $0x18] sm:$0xff]
      %v627 = vld [vmem:[%s6 + $0x20] sm:$0xff]
      %v628 = vld [vmem:[%s6 + $0x28] sm:$0xff]
      %v629 = vld [vmem:[%s6 + $0x30] sm:$0xff]
      %v630 = vld [vmem:[%s6 + $0x38] sm:$0xff]
      %s631 = scalar_lea.vmem %s6, 64
      %v632 = vld [vmem:[%s631] sm:$0xff]
      %v633 = vld [vmem:[%s631 + $0x8] sm:$0xff]
      %v634 = vld [vmem:[%s631 + $0x10] sm:$0xff]
      %v635 = vld [vmem:[%s631 + $0x18] sm:$0xff]
      %v636 = vld [vmem:[%s631 + $0x20] sm:$0xff]
      %v637 = vld [vmem:[%s631 + $0x28] sm:$0xff]
      %v638 = vld [vmem:[%s631 + $0x30] sm:$0xff]
      %v639 = vld [vmem:[%s631 + $0x38] sm:$0xff]
      %vm640 = vcmask 261120
      %v642 = vsel %vm640, %v632, 0
      %v645 = vsel %vm640, %v633, 0
      %v648 = vsel %vm640, %v634, 0
      %v651 = vsel %vm640, %v635, 0
      %v654 = vsel %vm640, %v636, 0
      %v657 = vsel %vm640, %v637, 0
      %v660 = vsel %vm640, %v638, 0
      %v663 = vsel %vm640, %v639, 0
      %665 = vmatpush.msra.mxu0 0.0
      %666 = vmatpush.msra.mxu0 0.0
      %667 = vmatpush.msra.mxu0 0.0
      %668 = vmatpush.msra.mxu0 0.0
      %669 = vmatpush.msra.mxu0 0.0
      %670 = vmatpush.msra.mxu0 0.0
      %671 = vmatpush.msra.mxu0 0.0
      %672 = vmatpush.msra.mxu0 0.0
      %673 = vmatpush.msra.mxu0 0.0
      %674 = vmatpush.msra.mxu0 0.0
      %675 = vmatpush.msra.mxu0 0.0
      %676 = vmatpush.msra.mxu0 0.0
      %677 = vmatpush.msra.mxu0 %v601
      %678 = vmatpush.msra.mxu0 %v600
      %679 = vmatpush.msra.mxu0 %v599
      %680 = vmatpush.msra.mxu0 %v598
      %681 = vmatmul.f32.gmra.mxu0 %v642
      %v682 = vpop.f32.mrf.mxu0
      %v683 = vadd.f32 0.0, %v682
      %684 = vmatmul.f32.gmra.mxu0 %v645
      %v685 = vpop.f32.mrf.mxu0
      %v686 = vadd.f32 0.0, %v685
      %687 = vmatmul.f32.gmra.mxu0 %v648
      %v688 = vpop.f32.mrf.mxu0
      %v689 = vadd.f32 0.0, %v688
      %690 = vmatmul.f32.gmra.mxu0 %v651
      %v691 = vpop.f32.mrf.mxu0
      %v692 = vadd.f32 0.0, %v691
      %693 = vmatmul.f32.gmra.mxu0 %v654
      %v694 = vpop.f32.mrf.mxu0
      %v695 = vadd.f32 0.0, %v694
      %696 = vmatmul.f32.gmra.mxu0 %v657
      %v697 = vpop.f32.mrf.mxu0
      %v698 = vadd.f32 0.0, %v697
      %699 = vmatmul.f32.gmra.mxu0 %v660
      %v700 = vpop.f32.mrf.mxu0
      %v701 = vadd.f32 0.0, %v700
      %702 = vmatmul.f32.gmra.mxu0 %v663
      %v703 = vpop.f32.mrf.mxu0
      %v704 = vadd.f32 0.0, %v703
      %705 = vdwg.mxu0
      %v707 = vsel %vm640, %v623, 0
      %v710 = vsel %vm640, %v624, 0
      %v713 = vsel %vm640, %v625, 0
      %v716 = vsel %vm640, %v626, 0
      %v719 = vsel %vm640, %v627, 0
      %v722 = vsel %vm640, %v628, 0
      %v725 = vsel %vm640, %v629, 0
      %v728 = vsel %vm640, %v630, 0
      %730 = vmatpush.msra.mxu0 0.0
      %731 = vmatpush.msra.mxu0 0.0
      %732 = vmatpush.msra.mxu0 0.0
      %733 = vmatpush.msra.mxu0 0.0
      %734 = vmatpush.msra.mxu0 0.0
      %735 = vmatpush.msra.mxu0 0.0
      %736 = vmatpush.msra.mxu0 0.0
      %737 = vmatpush.msra.mxu0 0.0
      %738 = vmatpush.msra.mxu0 0.0
      %739 = vmatpush.msra.mxu0 0.0
      %740 = vmatpush.msra.mxu0 0.0
      %741 = vmatpush.msra.mxu0 0.0
      %742 = vmatpush.msra.mxu0 %v622
      %743 = vmatpush.msra.mxu0 %v621
      %744 = vmatpush.msra.mxu0 %v620
      %745 = vmatpush.msra.mxu0 %v619
      %746 = vmatmul.f32.gmra.mxu0 %v707
      %v747 = vpop.f32.mrf.mxu0
      %v748 = vadd.f32 %v683, %v747
      %749 = vmatmul.f32.gmra.mxu0 %v710
      %v750 = vpop.f32.mrf.mxu0
      %v751 = vadd.f32 %v686, %v750
      %752 = vmatmul.f32.gmra.mxu0 %v713
      %v753 = vpop.f32.mrf.mxu0
      %v754 = vadd.f32 %v689, %v753
      %755 = vmatmul.f32.gmra.mxu0 %v716
      %v756 = vpop.f32.mrf.mxu0
      %v757 = vadd.f32 %v692, %v756
      %758 = vmatmul.f32.gmra.mxu0 %v719
      %v759 = vpop.f32.mrf.mxu0
      %v760 = vadd.f32 %v695, %v759
      %761 = vmatmul.f32.gmra.mxu0 %v722
      %v762 = vpop.f32.mrf.mxu0
      %v763 = vadd.f32 %v698, %v762
      %764 = vmatmul.f32.gmra.mxu0 %v725
      %v765 = vpop.f32.mrf.mxu0
      %v766 = vadd.f32 %v701, %v765
      %767 = vmatmul.f32.gmra.mxu0 %v728
      %v768 = vpop.f32.mrf.mxu0
      %v769 = vadd.f32 %v704, %v768
      %770 = vdwg.mxu0
      %771 = vrot.lane.b32.xlu0 %v598, 127
      %v772 = vpop.permute.xlu0 %771
      %773 = vrot.lane.b32.xlu0 %v599, 127
      %v774 = vpop.permute.xlu0 %773
      %775 = vrot.lane.b32.xlu0 %v600, 127
      %v776 = vpop.permute.xlu0 %775
      %777 = vrot.lane.b32.xlu0 %v601, 127
      %v778 = vpop.permute.xlu0 %777
      %vm783 = vcmask 56320
      %v784 = vsel %vm783, %v772, 0.0
      %v785 = vsel %vm783, %v774, 0.0
      %v786 = vsel %vm783, %v776, 0.0
      %v787 = vsel %vm783, %v778, 0.0
      %s788 = scalar_lea.vmem %s6, 128
      %v789 = vld [vmem:[%s788] sm:$0xff]
      %v790 = vld [vmem:[%s788 + $0x8] sm:$0xff]
      %v791 = vld [vmem:[%s788 + $0x10] sm:$0xff]
      %v792 = vld [vmem:[%s788 + $0x18] sm:$0xff]
      %v793 = vld [vmem:[%s788 + $0x20] sm:$0xff]
      %v794 = vld [vmem:[%s788 + $0x28] sm:$0xff]
      %v795 = vld [vmem:[%s788 + $0x30] sm:$0xff]
      %v796 = vld [vmem:[%s788 + $0x38] sm:$0xff]
      %v798 = vsel %vm640, %v789, 0
      %v801 = vsel %vm640, %v790, 0
      %v804 = vsel %vm640, %v791, 0
      %v807 = vsel %vm640, %v792, 0
      %v810 = vsel %vm640, %v793, 0
      %v813 = vsel %vm640, %v794, 0
      %v816 = vsel %vm640, %v795, 0
      %v819 = vsel %vm640, %v796, 0
      %821 = vmatpush.msra.mxu0 0.0
      %822 = vmatpush.msra.mxu0 0.0
      %823 = vmatpush.msra.mxu0 0.0
      %824 = vmatpush.msra.mxu0 0.0
      %825 = vmatpush.msra.mxu0 0.0
      %826 = vmatpush.msra.mxu0 0.0
      %827 = vmatpush.msra.mxu0 0.0
      %828 = vmatpush.msra.mxu0 0.0
      %829 = vmatpush.msra.mxu0 0.0
      %830 = vmatpush.msra.mxu0 0.0
      %831 = vmatpush.msra.mxu0 0.0
      %832 = vmatpush.msra.mxu0 0.0
      %833 = vmatpush.msra.mxu0 %v787
      %834 = vmatpush.msra.mxu0 %v786
      %835 = vmatpush.msra.mxu0 %v785
      %836 = vmatpush.msra.mxu0 %v784
      %837 = vmatmul.f32.gmra.mxu0 %v798
      %v838 = vpop.f32.mrf.mxu0
      %v839 = vadd.f32 0.0, %v838
      %840 = vmatmul.f32.gmra.mxu0 %v801
      %v841 = vpop.f32.mrf.mxu0
      %v842 = vadd.f32 0.0, %v841
      %843 = vmatmul.f32.gmra.mxu0 %v804
      %v844 = vpop.f32.mrf.mxu0
      %v845 = vadd.f32 0.0, %v844
      %846 = vmatmul.f32.gmra.mxu0 %v807
      %v847 = vpop.f32.mrf.mxu0
      %v848 = vadd.f32 0.0, %v847
      %849 = vmatmul.f32.gmra.mxu0 %v810
      %v850 = vpop.f32.mrf.mxu0
      %v851 = vadd.f32 0.0, %v850
      %852 = vmatmul.f32.gmra.mxu0 %v813
      %v853 = vpop.f32.mrf.mxu0
      %v854 = vadd.f32 0.0, %v853
      %855 = vmatmul.f32.gmra.mxu0 %v816
      %v856 = vpop.f32.mrf.mxu0
      %v857 = vadd.f32 0.0, %v856
      %858 = vmatmul.f32.gmra.mxu0 %v819
      %v859 = vpop.f32.mrf.mxu0
      %v860 = vadd.f32 0.0, %v859
      %861 = vdwg.mxu0
      %v862 = vadd.f32 %v748, %v839
      %v863 = vadd.f32 %v751, %v842
      %v864 = vadd.f32 %v754, %v845
      %v865 = vadd.f32 %v757, %v848
      %v866 = vadd.f32 %v760, %v851
      %v867 = vadd.f32 %v763, %v854
      %v868 = vadd.f32 %v766, %v857
      %v869 = vadd.f32 %v769, %v860
      %v870 = vld [vmem:[%s7] sm:$0xff]
      %v871 = vld [vmem:[%s7 + $0x8] sm:$0xff]
      %v872 = vld [vmem:[%s7 + $0x10] sm:$0xff]
      %v873 = vld [vmem:[%s7 + $0x18] sm:$0xff]
      %v874 = vld [vmem:[%s7 + $0x20] sm:$0xff]
      %v875 = vld [vmem:[%s7 + $0x28] sm:$0xff]
      %v876 = vld [vmem:[%s7 + $0x30] sm:$0xff]
      %v877 = vld [vmem:[%s7 + $0x38] sm:$0xff]
      %879 = vset.pattern.permute.xlu0 0
      %880 = vperm.xlu0 %879, %v870
      %v881 = vpop.permute.xlu0 %880
      %884 = vset.pattern.permute.xlu0 0
      %885 = vperm.xlu0 %884, %v871
      %v886 = vpop.permute.xlu0 %885
      %889 = vset.pattern.permute.xlu0 0
      %890 = vperm.xlu0 %889, %v872
      %v891 = vpop.permute.xlu0 %890
      %894 = vset.pattern.permute.xlu0 0
      %895 = vperm.xlu0 %894, %v873
      %v896 = vpop.permute.xlu0 %895
      %899 = vset.pattern.permute.xlu0 0
      %900 = vperm.xlu0 %899, %v874
      %v901 = vpop.permute.xlu0 %900
      %904 = vset.pattern.permute.xlu0 0
      %905 = vperm.xlu0 %904, %v875
      %v906 = vpop.permute.xlu0 %905
      %909 = vset.pattern.permute.xlu0 0
      %910 = vperm.xlu0 %909, %v876
      %v911 = vpop.permute.xlu0 %910
      %914 = vset.pattern.permute.xlu0 0
      %915 = vperm.xlu0 %914, %v877
      %v916 = vpop.permute.xlu0 %915
      %v918 = vadd.f32 %v862, %v881
      %v919 = vadd.f32 %v863, %v886
      %v920 = vadd.f32 %v864, %v891
      %v921 = vadd.f32 %v865, %v896
      %v922 = vadd.f32 %v866, %v901
      %v923 = vadd.f32 %v867, %v906
      %v924 = vadd.f32 %v868, %v911
      %v925 = vadd.f32 %v869, %v916
      %v926 = vtanh.pop %v918
      %v927 = vtanh.pop %v919
      %v928 = vtanh.pop %v920
      %v929 = vtanh.pop %v921
      %v930 = vxor.u32 %v922, 2147483648
      %v931 = vxor.u32 %v923, 2147483648
      %v932 = vxor.u32 %v924, 2147483648
      %v933 = vxor.u32 %v925, 2147483648
      %v934 = vmul.f32 %v930, 1.442695
      %v935 = vpow.pop %v934
      %v936 = vmul.f32 %v931, 1.442695
      %v937 = vpow.pop %v936
      %v938 = vmul.f32 %v932, 1.442695
      %v939 = vpow.pop %v938
      %v940 = vmul.f32 %v933, 1.442695
      %v941 = vpow.pop %v940
      %v942 = vadd.f32 %v935, 1.0
      %v943 = vadd.f32 %v937, 1.0
      %v944 = vadd.f32 %v939, 1.0
      %v945 = vadd.f32 %v941, 1.0
      %v946 = vrcp.pop %v942
      %v947 = vmul.f32 %v942, %v946
      %v948 = vsub.f32 1.0, %v947
      %v949 = vmul.f32 %v946, %v948
      %v950 = vadd.f32 %v946, %v949
      %vm951 = vweird.f32 %v942
      %vm952 = vweird.f32 %v946
      %vm953 = vmor %vm951, %vm952
      %v954 = vsel %vm953, %v946, %v950
      %v955 = vand.u32 2147483647, %v942
      %vm956 = vcmp.eq.f32.partialorder %v955, 8.507059e+37
      %v957 = vand.u32 %v942, 2147483648
      %v958 = vor.u32 1.1754944e-38, %v957
      %v959 = vsel %vm956, %v958, %v954
      %v960 = vmul.f32 1.0, %v959
      %v961 = vrcp.pop %v943
      %v962 = vmul.f32 %v943, %v961
      %v963 = vsub.f32 1.0, %v962
      %v964 = vmul.f32 %v961, %v963
      %v965 = vadd.f32 %v961, %v964
      %vm966 = vweird.f32 %v943
      %vm967 = vweird.f32 %v961
      %vm968 = vmor %vm966, %vm967
      %v969 = vsel %vm968, %v961, %v965
      %v970 = vand.u32 2147483647, %v943
      %vm971 = vcmp.eq.f32.partialorder %v970, 8.507059e+37
      %v972 = vand.u32 %v943, 2147483648
      %v973 = vor.u32 1.1754944e-38, %v972
      %v974 = vsel %vm971, %v973, %v969
      %v975 = vmul.f32 1.0, %v974
      %v976 = vrcp.pop %v944
      %v977 = vmul.f32 %v944, %v976
      %v978 = vsub.f32 1.0, %v977
      %v979 = vmul.f32 %v976, %v978
      %v980 = vadd.f32 %v976, %v979
      %vm981 = vweird.f32 %v944
      %vm982 = vweird.f32 %v976
      %vm983 = vmor %vm981, %vm982
      %v984 = vsel %vm983, %v976, %v980
      %v985 = vand.u32 2147483647, %v944
      %vm986 = vcmp.eq.f32.partialorder %v985, 8.507059e+37
      %v987 = vand.u32 %v944, 2147483648
      %v988 = vor.u32 1.1754944e-38, %v987
      %v989 = vsel %vm986, %v988, %v984
      %v990 = vmul.f32 1.0, %v989
      %v991 = vrcp.pop %v945
      %v992 = vmul.f32 %v945, %v991
      %v993 = vsub.f32 1.0, %v992
      %v994 = vmul.f32 %v991, %v993
      %v995 = vadd.f32 %v991, %v994
      %vm996 = vweird.f32 %v945
      %vm997 = vweird.f32 %v991
      %vm998 = vmor %vm996, %vm997
      %v999 = vsel %vm998, %v991, %v995
      %v1000 = vand.u32 2147483647, %v945
      %vm1001 = vcmp.eq.f32.partialorder %v1000, 8.507059e+37
      %v1002 = vand.u32 %v945, 2147483648
      %v1003 = vor.u32 1.1754944e-38, %v1002
      %v1004 = vsel %vm1001, %v1003, %v999
      %v1005 = vmul.f32 1.0, %v1004
      %v1006 = vmul.f32 %v926, %v960
      %v1007 = vmul.f32 %v927, %v975
      %v1008 = vmul.f32 %v928, %v990
      %v1009 = vmul.f32 %v929, %v1005
      %v1010 = vld [vmem:[%s8] sm:$0xff]
      %v1011 = vld [vmem:[%s8 + $0x8] sm:$0xff]
      %v1012 = vld [vmem:[%s8 + $0x10] sm:$0xff]
      %v1013 = vld [vmem:[%s8 + $0x18] sm:$0xff]
      %v1014 = vld [vmem:[%s8 + $0x20] sm:$0xff]
      %v1015 = vld [vmem:[%s8 + $0x28] sm:$0xff]
      %v1016 = vld [vmem:[%s8 + $0x30] sm:$0xff]
      %v1017 = vld [vmem:[%s8 + $0x38] sm:$0xff]
      %v1018 = vld [vmem:[%s9] sm:$0xff]
      %v1019 = vld [vmem:[%s9 + $0x8] sm:$0xff]
      %v1020 = vld [vmem:[%s9 + $0x10] sm:$0xff]
      %v1021 = vld [vmem:[%s9 + $0x18] sm:$0xff]
      %v1022 = vld [vmem:[%s9 + $0x20] sm:$0xff]
      %v1023 = vld [vmem:[%s9 + $0x28] sm:$0xff]
      %v1024 = vld [vmem:[%s9 + $0x30] sm:$0xff]
      %v1025 = vld [vmem:[%s9 + $0x38] sm:$0xff]
      %1027 = vset.pattern.permute.xlu0 0
      %1028 = vperm.xlu0 %1027, %v1018
      %v1029 = vpop.permute.xlu0 %1028
      %1032 = vset.pattern.permute.xlu0 0
      %1033 = vperm.xlu0 %1032, %v1019
      %v1034 = vpop.permute.xlu0 %1033
      %1037 = vset.pattern.permute.xlu0 0
      %1038 = vperm.xlu0 %1037, %v1020
      %v1039 = vpop.permute.xlu0 %1038
      %1042 = vset.pattern.permute.xlu0 0
      %1043 = vperm.xlu0 %1042, %v1021
      %v1044 = vpop.permute.xlu0 %1043
      %1047 = vset.pattern.permute.xlu0 0
      %1048 = vperm.xlu0 %1047, %v1022
      %v1049 = vpop.permute.xlu0 %1048
      %1052 = vset.pattern.permute.xlu0 0
      %1053 = vperm.xlu0 %1052, %v1023
      %v1054 = vpop.permute.xlu0 %1053
      %1057 = vset.pattern.permute.xlu0 0
      %1058 = vperm.xlu0 %1057, %v1024
      %v1059 = vpop.permute.xlu0 %1058
      %1062 = vset.pattern.permute.xlu0 0
      %1063 = vperm.xlu0 %1062, %v1025
      %v1064 = vpop.permute.xlu0 %1063
      %v1067 = vsel %vm640, %v1010, 0
      %v1070 = vsel %vm640, %v1011, 0
      %v1073 = vsel %vm640, %v1012, 0
      %v1076 = vsel %vm640, %v1013, 0
      %v1079 = vsel %vm640, %v1014, 0
      %v1082 = vsel %vm640, %v1015, 0
      %v1085 = vsel %vm640, %v1016, 0
      %v1088 = vsel %vm640, %v1017, 0
      %1090 = vmatpush.msra.mxu0 0.0
      %1091 = vmatpush.msra.mxu0 0.0
      %1092 = vmatpush.msra.mxu0 0.0
      %1093 = vmatpush.msra.mxu0 0.0
      %1094 = vmatpush.msra.mxu0 0.0
      %1095 = vmatpush.msra.mxu0 0.0
      %1096 = vmatpush.msra.mxu0 0.0
      %1097 = vmatpush.msra.mxu0 0.0
      %1098 = vmatpush.msra.mxu0 0.0
      %1099 = vmatpush.msra.mxu0 0.0
      %1100 = vmatpush.msra.mxu0 0.0
      %1101 = vmatpush.msra.mxu0 0.0
      %1102 = vmatpush.msra.mxu0 %v1009
      %1103 = vmatpush.msra.mxu0 %v1008
      %1104 = vmatpush.msra.mxu0 %v1007
      %1105 = vmatpush.msra.mxu0 %v1006
      %1106 = vmatmul.f32.gmra.mxu0 %v1067
      %v1107 = vpop.f32.mrf.mxu0
      %v1108 = vadd.f32 %v1029, %v1107
      %1109 = vmatmul.f32.gmra.mxu0 %v1070
      %v1110 = vpop.f32.mrf.mxu0
      %v1111 = vadd.f32 %v1034, %v1110
      %1112 = vmatmul.f32.gmra.mxu0 %v1073
      %v1113 = vpop.f32.mrf.mxu0
      %v1114 = vadd.f32 %v1039, %v1113
      %1115 = vmatmul.f32.gmra.mxu0 %v1076
      %v1116 = vpop.f32.mrf.mxu0
      %v1117 = vadd.f32 %v1044, %v1116
      %1118 = vmatmul.f32.gmra.mxu0 %v1079
      %v1119 = vpop.f32.mrf.mxu0
      %v1120 = vadd.f32 %v1049, %v1119
      %1121 = vmatmul.f32.gmra.mxu0 %v1082
      %v1122 = vpop.f32.mrf.mxu0
      %v1123 = vadd.f32 %v1054, %v1122
      %1124 = vmatmul.f32.gmra.mxu0 %v1085
      %v1125 = vpop.f32.mrf.mxu0
      %v1126 = vadd.f32 %v1059, %v1125
      %1127 = vmatmul.f32.gmra.mxu0 %v1088
      %v1128 = vpop.f32.mrf.mxu0
      %v1129 = vadd.f32 %v1064, %v1128
      %1130 = vdwg.mxu0
      %v1131 = vadd.f32 %v598, %v1108
      %v1132 = vadd.f32 %v599, %v1111
      %v1133 = vadd.f32 %v600, %v1114
      %v1134 = vadd.f32 %v601, %v1117
      %v1135 = vmul.f32 %v1131, %v512
      %v1136 = vmul.f32 %v1132, %v512
      %v1137 = vmul.f32 %v1133, %v512
      %v1138 = vmul.f32 %v1134, %v512
      %1139 = vst.msk [vmem:[#allocation2] sm:$0xff] %vm544, %v1135
      %1140 = vst.msk [vmem:[#allocation2 + $0x8] sm:$0xff] %vm544, %v1136
      %1141 = vst.msk [vmem:[#allocation2 + $0x10] sm:$0xff] %vm544, %v1137
      %1142 = vst.msk [vmem:[#allocation2 + $0x18] sm:$0xff] %vm544, %v1138
      %v1143 = vld [vmem:[#allocation3] sm:$0xff]
      %v1144 = vld [vmem:[#allocation3 + $0x8] sm:$0xff]
      %v1145 = vld [vmem:[#allocation3 + $0x10] sm:$0xff]
      %v1146 = vld [vmem:[#allocation3 + $0x18] sm:$0xff]
      %v1147 = vadd.f32 %v1143, %v1120
      %v1148 = vadd.f32 %v1144, %v1123
      %v1149 = vadd.f32 %v1145, %v1126
      %v1150 = vadd.f32 %v1146, %v1129
      %1151 = vst.msk [vmem:[#allocation3] sm:$0xff] %vm544, %v1147
      %1152 = vst.msk [vmem:[#allocation3 + $0x8] sm:$0xff] %vm544, %v1148
      %1153 = vst.msk [vmem:[#allocation3 + $0x10] sm:$0xff] %vm544, %v1149
      %1154 = vst.msk [vmem:[#allocation3 + $0x18] sm:$0xff] %vm544, %v1150
      %v1155 = vld [vmem:[#allocation2] sm:$0xff]
      %v1156 = vld [vmem:[#allocation2 + $0x8] sm:$0xff]
      %v1157 = vld [vmem:[#allocation2 + $0x10] sm:$0xff]
      %v1158 = vld [vmem:[#allocation2 + $0x18] sm:$0xff]
      %1163 = vrot.lane.b32.xlu0 %v1155, 2
      %v1164 = vpop.permute.xlu0 %1163
      %1165 = vrot.lane.b32.xlu0 %v1156, 2
      %v1166 = vpop.permute.xlu0 %1165
      %1167 = vrot.lane.b32.xlu0 %v1157, 2
      %v1168 = vpop.permute.xlu0 %1167
      %1169 = vrot.lane.b32.xlu0 %v1158, 2
      %v1170 = vpop.permute.xlu0 %1169
      %vm1175 = vcmask 15360
      %v1176 = vsel %vm1175, 0.0, %v1164
      %v1177 = vsel %vm1175, 0.0, %v1166
      %v1178 = vsel %vm1175, 0.0, %v1168
      %v1179 = vsel %vm1175, 0.0, %v1170
      %s1180 = scalar_lea.vmem %s6, 192
      %v1181 = vld [vmem:[%s1180] sm:$0xff]
      %v1182 = vld [vmem:[%s1180 + $0x8] sm:$0xff]
      %v1183 = vld [vmem:[%s1180 + $0x10] sm:$0xff]
      %v1184 = vld [vmem:[%s1180 + $0x18] sm:$0xff]
      %v1185 = vld [vmem:[%s1180 + $0x20] sm:$0xff]
      %v1186 = vld [vmem:[%s1180 + $0x28] sm:$0xff]
      %v1187 = vld [vmem:[%s1180 + $0x30] sm:$0xff]
      %v1188 = vld [vmem:[%s1180 + $0x38] sm:$0xff]
      %s1189 = scalar_lea.vmem %s6, 256
      %v1190 = vld [vmem:[%s1189] sm:$0xff]
      %v1191 = vld [vmem:[%s1189 + $0x8] sm:$0xff]
      %v1192 = vld [vmem:[%s1189 + $0x10] sm:$0xff]
      %v1193 = vld [vmem:[%s1189 + $0x18] sm:$0xff]
      %v1194 = vld [vmem:[%s1189 + $0x20] sm:$0xff]
      %v1195 = vld [vmem:[%s1189 + $0x28] sm:$0xff]
      %v1196 = vld [vmem:[%s1189 + $0x30] sm:$0xff]
      %v1197 = vld [vmem:[%s1189 + $0x38] sm:$0xff]
      %v1199 = vsel %vm640, %v1190, 0
      %v1202 = vsel %vm640, %v1191, 0
      %v1205 = vsel %vm640, %v1192, 0
      %v1208 = vsel %vm640, %v1193, 0
      %v1211 = vsel %vm640, %v1194, 0
      %v1214 = vsel %vm640, %v1195, 0
      %v1217 = vsel %vm640, %v1196, 0
      %v1220 = vsel %vm640, %v1197, 0
      %1222 = vmatpush.msra.mxu0 0.0
      %1223 = vmatpush.msra.mxu0 0.0
      %1224 = vmatpush.msra.mxu0 0.0
      %1225 = vmatpush.msra.mxu0 0.0
      %1226 = vmatpush.msra.mxu0 0.0
      %1227 = vmatpush.msra.mxu0 0.0
      %1228 = vmatpush.msra.mxu0 0.0
      %1229 = vmatpush.msra.mxu0 0.0
      %1230 = vmatpush.msra.mxu0 0.0
      %1231 = vmatpush.msra.mxu0 0.0
      %1232 = vmatpush.msra.mxu0 0.0
      %1233 = vmatpush.msra.mxu0 0.0
      %1234 = vmatpush.msra.mxu0 %v1158
      %1235 = vmatpush.msra.mxu0 %v1157
      %1236 = vmatpush.msra.mxu0 %v1156
      %1237 = vmatpush.msra.mxu0 %v1155
      %1238 = vmatmul.f32.gmra.mxu0 %v1199
      %v1239 = vpop.f32.mrf.mxu0
      %v1240 = vadd.f32 0.0, %v1239
      %1241 = vmatmul.f32.gmra.mxu0 %v1202
      %v1242 = vpop.f32.mrf.mxu0
      %v1243 = vadd.f32 0.0, %v1242
      %1244 = vmatmul.f32.gmra.mxu0 %v1205
      %v1245 = vpop.f32.mrf.mxu0
      %v1246 = vadd.f32 0.0, %v1245
      %1247 = vmatmul.f32.gmra.mxu0 %v1208
      %v1248 = vpop.f32.mrf.mxu0
      %v1249 = vadd.f32 0.0, %v1248
      %1250 = vmatmul.f32.gmra.mxu0 %v1211
      %v1251 = vpop.f32.mrf.mxu0
      %v1252 = vadd.f32 0.0, %v1251
      %1253 = vmatmul.f32.gmra.mxu0 %v1214
      %v1254 = vpop.f32.mrf.mxu0
      %v1255 = vadd.f32 0.0, %v1254
      %1256 = vmatmul.f32.gmra.mxu0 %v1217
      %v1257 = vpop.f32.mrf.mxu0
      %v1258 = vadd.f32 0.0, %v1257
      %1259 = vmatmul.f32.gmra.mxu0 %v1220
      %v1260 = vpop.f32.mrf.mxu0
      %v1261 = vadd.f32 0.0, %v1260
      %1262 = vdwg.mxu0
      %v1264 = vsel %vm640, %v1181, 0
      %v1267 = vsel %vm640, %v1182, 0
      %v1270 = vsel %vm640, %v1183, 0
      %v1273 = vsel %vm640, %v1184, 0
      %v1276 = vsel %vm640, %v1185, 0
      %v1279 = vsel %vm640, %v1186, 0
      %v1282 = vsel %vm640, %v1187, 0
      %v1285 = vsel %vm640, %v1188, 0
      %1287 = vmatpush.msra.mxu0 0.0
      %1288 = vmatpush.msra.mxu0 0.0
      %1289 = vmatpush.msra.mxu0 0.0
      %1290 = vmatpush.msra.mxu0 0.0
      %1291 = vmatpush.msra.mxu0 0.0
      %1292 = vmatpush.msra.mxu0 0.0
      %1293 = vmatpush.msra.mxu0 0.0
      %1294 = vmatpush.msra.mxu0 0.0
      %1295 = vmatpush.msra.mxu0 0.0
      %1296 = vmatpush.msra.mxu0 0.0
      %1297 = vmatpush.msra.mxu0 0.0
      %1298 = vmatpush.msra.mxu0 0.0
      %1299 = vmatpush.msra.mxu0 %v1179
      %1300 = vmatpush.msra.mxu0 %v1178
      %1301 = vmatpush.msra.mxu0 %v1177
      %1302 = vmatpush.msra.mxu0 %v1176
      %1303 = vmatmul.f32.gmra.mxu0 %v1264
      %v1304 = vpop.f32.mrf.mxu0
      %v1305 = vadd.f32 %v1240, %v1304
      %1306 = vmatmul.f32.gmra.mxu0 %v1267
      %v1307 = vpop.f32.mrf.mxu0
      %v1308 = vadd.f32 %v1243, %v1307
      %1309 = vmatmul.f32.gmra.mxu0 %v1270
      %v1310 = vpop.f32.mrf.mxu0
      %v1311 = vadd.f32 %v1246, %v1310
      %1312 = vmatmul.f32.gmra.mxu0 %v1273
      %v1313 = vpop.f32.mrf.mxu0
      %v1314 = vadd.f32 %v1249, %v1313
      %1315 = vmatmul.f32.gmra.mxu0 %v1276
      %v1316 = vpop.f32.mrf.mxu0
      %v1317 = vadd.f32 %v1252, %v1316
      %1318 = vmatmul.f32.gmra.mxu0 %v1279
      %v1319 = vpop.f32.mrf.mxu0
      %v1320 = vadd.f32 %v1255, %v1319
      %1321 = vmatmul.f32.gmra.mxu0 %v1282
      %v1322 = vpop.f32.mrf.mxu0
      %v1323 = vadd.f32 %v1258, %v1322
      %1324 = vmatmul.f32.gmra.mxu0 %v1285
      %v1325 = vpop.f32.mrf.mxu0
      %v1326 = vadd.f32 %v1261, %v1325
      %1327 = vdwg.mxu0
      %1328 = vrot.lane.b32.xlu0 %v1155, 126
      %v1329 = vpop.permute.xlu0 %1328
      %1330 = vrot.lane.b32.xlu0 %v1156, 126
      %v1331 = vpop.permute.xlu0 %1330
      %1332 = vrot.lane.b32.xlu0 %v1157, 126
      %v1333 = vpop.permute.xlu0 %1332
      %1334 = vrot.lane.b32.xlu0 %v1158, 126
      %v1335 = vpop.permute.xlu0 %1334
      %vm1340 = vcmask 48128
      %v1341 = vsel %vm1340, %v1329, 0.0
      %v1342 = vsel %vm1340, %v1331, 0.0
      %v1343 = vsel %vm1340, %v1333, 0.0
      %v1344 = vsel %vm1340, %v1335, 0.0
      %s1345 = scalar_lea.vmem %s6, 320
      %v1346 = vld [vmem:[%s1345] sm:$0xff]
      %v1347 = vld [vmem:[%s1345 + $0x8] sm:$0xff]
      %v1348 = vld [vmem:[%s1345 + $0x10] sm:$0xff]
      %v1349 = vld [vmem:[%s1345 + $0x18] sm:$0xff]
      %v1350 = vld [vmem:[%s1345 + $0x20] sm:$0xff]
      %v1351 = vld [vmem:[%s1345 + $0x28] sm:$0xff]
      %v1352 = vld [vmem:[%s1345 + $0x30] sm:$0xff]
      %v1353 = vld [vmem:[%s1345 + $0x38] sm:$0xff]
      %v1355 = vsel %vm640, %v1346, 0
      %v1358 = vsel %vm640, %v1347, 0
      %v1361 = vsel %vm640, %v1348, 0
      %v1364 = vsel %vm640, %v1349, 0
      %v1367 = vsel %vm640, %v1350, 0
      %v1370 = vsel %vm640, %v1351, 0
      %v1373 = vsel %vm640, %v1352, 0
      %v1376 = vsel %vm640, %v1353, 0
      %1378 = vmatpush.msra.mxu0 0.0
      %1379 = vmatpush.msra.mxu0 0.0
      %1380 = vmatpush.msra.mxu0 0.0
      %1381 = vmatpush.msra.mxu0 0.0
      %1382 = vmatpush.msra.mxu0 0.0
      %1383 = vmatpush.msra.mxu0 0.0
      %1384 = vmatpush.msra.mxu0 0.0
      %1385 = vmatpush.msra.mxu0 0.0
      %1386 = vmatpush.msra.mxu0 0.0
      %1387 = vmatpush.msra.mxu0 0.0
      %1388 = vmatpush.msra.mxu0 0.0
      %1389 = vmatpush.msra.mxu0 0.0
      %1390 = vmatpush.msra.mxu0 %v1344
      %1391 = vmatpush.msra.mxu0 %v1343
      %1392 = vmatpush.msra.mxu0 %v1342
      %1393 = vmatpush.msra.mxu0 %v1341
      %1394 = vmatmul.f32.gmra.mxu0 %v1355
      %v1395 = vpop.f32.mrf.mxu0
      %v1396 = vadd.f32 0.0, %v1395
      %1397 = vmatmul.f32.gmra.mxu0 %v1358
      %v1398 = vpop.f32.mrf.mxu0
      %v1399 = vadd.f32 0.0, %v1398
      %1400 = vmatmul.f32.gmra.mxu0 %v1361
      %v1401 = vpop.f32.mrf.mxu0
      %v1402 = vadd.f32 0.0, %v1401
      %1403 = vmatmul.f32.gmra.mxu0 %v1364
      %v1404 = vpop.f32.mrf.mxu0
      %v1405 = vadd.f32 0.0, %v1404
      %1406 = vmatmul.f32.gmra.mxu0 %v1367
      %v1407 = vpop.f32.mrf.mxu0
      %v1408 = vadd.f32 0.0, %v1407
      %1409 = vmatmul.f32.gmra.mxu0 %v1370
      %v1410 = vpop.f32.mrf.mxu0
      %v1411 = vadd.f32 0.0, %v1410
      %1412 = vmatmul.f32.gmra.mxu0 %v1373
      %v1413 = vpop.f32.mrf.mxu0
      %v1414 = vadd.f32 0.0, %v1413
      %1415 = vmatmul.f32.gmra.mxu0 %v1376
      %v1416 = vpop.f32.mrf.mxu0
      %v1417 = vadd.f32 0.0, %v1416
      %1418 = vdwg.mxu0
      %v1419 = vadd.f32 %v1305, %v1396
      %v1420 = vadd.f32 %v1308, %v1399
      %v1421 = vadd.f32 %v1311, %v1402
      %v1422 = vadd.f32 %v1314, %v1405
      %v1423 = vadd.f32 %v1317, %v1408
      %v1424 = vadd.f32 %v1320, %v1411
      %v1425 = vadd.f32 %v1323, %v1414
      %v1426 = vadd.f32 %v1326, %v1417
      %s1427 = scalar_lea.vmem %s7, 64
      %v1428 = vld [vmem:[%s1427] sm:$0xff]
      %v1429 = vld [vmem:[%s1427 + $0x8] sm:$0xff]
      %v1430 = vld [vmem:[%s1427 + $0x10] sm:$0xff]
      %v1431 = vld [vmem:[%s1427 + $0x18] sm:$0xff]
      %v1432 = vld [vmem:[%s1427 + $0x20] sm:$0xff]
      %v1433 = vld [vmem:[%s1427 + $0x28] sm:$0xff]
      %v1434 = vld [vmem:[%s1427 + $0x30] sm:$0xff]
      %v1435 = vld [vmem:[%s1427 + $0x38] sm:$0xff]
      %1437 = vset.pattern.permute.xlu0 0
      %1438 = vperm.xlu0 %1437, %v1428
      %v1439 = vpop.permute.xlu0 %1438
      %1442 = vset.pattern.permute.xlu0 0
      %1443 = vperm.xlu0 %1442, %v1429
      %v1444 = vpop.permute.xlu0 %1443
      %1447 = vset.pattern.permute.xlu0 0
      %1448 = vperm.xlu0 %1447, %v1430
      %v1449 = vpop.permute.xlu0 %1448
      %1452 = vset.pattern.permute.xlu0 0
      %1453 = vperm.xlu0 %1452, %v1431
      %v1454 = vpop.permute.xlu0 %1453
      %1457 = vset.pattern.permute.xlu0 0
      %1458 = vperm.xlu0 %1457, %v1432
      %v1459 = vpop.permute.xlu0 %1458
      %1462 = vset.pattern.permute.xlu0 0
      %1463 = vperm.xlu0 %1462, %v1433
      %v1464 = vpop.permute.xlu0 %1463
      %1467 = vset.pattern.permute.xlu0 0
      %1468 = vperm.xlu0 %1467, %v1434
      %v1469 = vpop.permute.xlu0 %1468
      %1472 = vset.pattern.permute.xlu0 0
      %1473 = vperm.xlu0 %1472, %v1435
      %v1474 = vpop.permute.xlu0 %1473
      %v1476 = vadd.f32 %v1419, %v1439
      %v1477 = vadd.f32 %v1420, %v1444
      %v1478 = vadd.f32 %v1421, %v1449
      %v1479 = vadd.f32 %v1422, %v1454
      %v1480 = vadd.f32 %v1423, %v1459
      %v1481 = vadd.f32 %v1424, %v1464
      %v1482 = vadd.f32 %v1425, %v1469
      %v1483 = vadd.f32 %v1426, %v1474
      %v1484 = vtanh.pop %v1476
      %v1485 = vtanh.pop %v1477
      %v1486 = vtanh.pop %v1478
      %v1487 = vtanh.pop %v1479
      %v1488 = vxor.u32 %v1480, 2147483648
      %v1489 = vxor.u32 %v1481, 2147483648
      %v1490 = vxor.u32 %v1482, 2147483648
      %v1491 = vxor.u32 %v1483, 2147483648
      %v1492 = vmul.f32 %v1488, 1.442695
      %v1493 = vpow.pop %v1492
      %v1494 = vmul.f32 %v1489, 1.442695
      %v1495 = vpow.pop %v1494
      %v1496 = vmul.f32 %v1490, 1.442695
      %v1497 = vpow.pop %v1496
      %v1498 = vmul.f32 %v1491, 1.442695
      %v1499 = vpow.pop %v1498
      %v1500 = vadd.f32 %v1493, 1.0
      %v1501 = vadd.f32 %v1495, 1.0
      %v1502 = vadd.f32 %v1497, 1.0
      %v1503 = vadd.f32 %v1499, 1.0
      %v1504 = vrcp.pop %v1500
      %v1505 = vmul.f32 %v1500, %v1504
      %v1506 = vsub.f32 1.0, %v1505
      %v1507 = vmul.f32 %v1504, %v1506
      %v1508 = vadd.f32 %v1504, %v1507
      %vm1509 = vweird.f32 %v1500
      %vm1510 = vweird.f32 %v1504
      %vm1511 = vmor %vm1509, %vm1510
      %v1512 = vsel %vm1511, %v1504, %v1508
      %v1513 = vand.u32 2147483647, %v1500
      %vm1514 = vcmp.eq.f32.partialorder %v1513, 8.507059e+37
      %v1515 = vand.u32 %v1500, 2147483648
      %v1516 = vor.u32 1.1754944e-38, %v1515
      %v1517 = vsel %vm1514, %v1516, %v1512
      %v1518 = vmul.f32 1.0, %v1517
      %v1519 = vrcp.pop %v1501
      %v1520 = vmul.f32 %v1501, %v1519
      %v1521 = vsub.f32 1.0, %v1520
      %v1522 = vmul.f32 %v1519, %v1521
      %v1523 = vadd.f32 %v1519, %v1522
      %vm1524 = vweird.f32 %v1501
      %vm1525 = vweird.f32 %v1519
      %vm1526 = vmor %vm1524, %vm1525
      %v1527 = vsel %vm1526, %v1519, %v1523
      %v1528 = vand.u32 2147483647, %v1501
      %vm1529 = vcmp.eq.f32.partialorder %v1528, 8.507059e+37
      %v1530 = vand.u32 %v1501, 2147483648
      %v1531 = vor.u32 1.1754944e-38, %v1530
      %v1532 = vsel %vm1529, %v1531, %v1527
      %v1533 = vmul.f32 1.0, %v1532
      %v1534 = vrcp.pop %v1502
      %v1535 = vmul.f32 %v1502, %v1534
      %v1536 = vsub.f32 1.0, %v1535
      %v1537 = vmul.f32 %v1534, %v1536
      %v1538 = vadd.f32 %v1534, %v1537
      %vm1539 = vweird.f32 %v1502
      %vm1540 = vweird.f32 %v1534
      %vm1541 = vmor %vm1539, %vm1540
      %v1542 = vsel %vm1541, %v1534, %v1538
      %v1543 = vand.u32 2147483647, %v1502
      %vm1544 = vcmp.eq.f32.partialorder %v1543, 8.507059e+37
      %v1545 = vand.u32 %v1502, 2147483648
      %v1546 = vor.u32 1.1754944e-38, %v1545
      %v1547 = vsel %vm1544, %v1546, %v1542
      %v1548 = vmul.f32 1.0, %v1547
      %v1549 = vrcp.pop %v1503
      %v1550 = vmul.f32 %v1503, %v1549
      %v1551 = vsub.f32 1.0, %v1550
      %v1552 = vmul.f32 %v1549, %v1551
      %v1553 = vadd.f32 %v1549, %v1552
      %vm1554 = vweird.f32 %v1503
      %vm1555 = vweird.f32 %v1549
      %vm1556 = vmor %vm1554, %vm1555
      %v1557 = vsel %vm1556, %v1549, %v1553
      %v1558 = vand.u32 2147483647, %v1503
      %vm1559 = vcmp.eq.f32.partialorder %v1558, 8.507059e+37
      %v1560 = vand.u32 %v1503, 2147483648
      %v1561 = vor.u32 1.1754944e-38, %v1560
      %v1562 = vsel %vm1559, %v1561, %v1557
      %v1563 = vmul.f32 1.0, %v1562
      %v1564 = vmul.f32 %v1484, %v1518
      %v1565 = vmul.f32 %v1485, %v1533
      %v1566 = vmul.f32 %v1486, %v1548
      %v1567 = vmul.f32 %v1487, %v1563
      %s1568 = scalar_lea.vmem %s8, 64
      %v1569 = vld [vmem:[%s1568] sm:$0xff]
      %v1570 = vld [vmem:[%s1568 + $0x8] sm:$0xff]
      %v1571 = vld [vmem:[%s1568 + $0x10] sm:$0xff]
      %v1572 = vld [vmem:[%s1568 + $0x18] sm:$0xff]
      %v1573 = vld [vmem:[%s1568 + $0x20] sm:$0xff]
      %v1574 = vld [vmem:[%s1568 + $0x28] sm:$0xff]
      %v1575 = vld [vmem:[%s1568 + $0x30] sm:$0xff]
      %v1576 = vld [vmem:[%s1568 + $0x38] sm:$0xff]
      %s1577 = scalar_lea.vmem %s9, 64
      %v1578 = vld [vmem:[%s1577] sm:$0xff]
      %v1579 = vld [vmem:[%s1577 + $0x8] sm:$0xff]
      %v1580 = vld [vmem:[%s1577 + $0x10] sm:$0xff]
      %v1581 = vld [vmem:[%s1577 + $0x18] sm:$0xff]
      %v1582 = vld [vmem:[%s1577 + $0x20] sm:$0xff]
      %v1583 = vld [vmem:[%s1577 + $0x28] sm:$0xff]
      %v1584 = vld [vmem:[%s1577 + $0x30] sm:$0xff]
      %v1585 = vld [vmem:[%s1577 + $0x38] sm:$0xff]
      %1587 = vset.pattern.permute.xlu0 0
      %1588 = vperm.xlu0 %1587, %v1578
      %v1589 = vpop.permute.xlu0 %1588
      %1592 = vset.pattern.permute.xlu0 0
      %1593 = vperm.xlu0 %1592, %v1579
      %v1594 = vpop.permute.xlu0 %1593
      %1597 = vset.pattern.permute.xlu0 0
      %1598 = vperm.xlu0 %1597, %v1580
      %v1599 = vpop.permute.xlu0 %1598
      %1602 = vset.pattern.permute.xlu0 0
      %1603 = vperm.xlu0 %1602, %v1581
      %v1604 = vpop.permute.xlu0 %1603
      %1607 = vset.pattern.permute.xlu0 0
      %1608 = vperm.xlu0 %1607, %v1582
      %v1609 = vpop.permute.xlu0 %1608
      %1611 = vset.pattern.permute.xlu0 0
      %1612 = vperm.xlu0 %1611, %v1583
      %v1613 = vpop.permute.xlu0 %1612
      %1615 = vset.pattern.permute.xlu0 0
      %1616 = vperm.xlu0 %1615, %v1584
      %v1617 = vpop.permute.xlu0 %1616
      %1619 = vset.pattern.permute.xlu0 0
      %1620 = vperm.xlu0 %1619, %v1585
      %v1621 = vpop.permute.xlu0 %1620
      %v1623 = vsel %vm640, %v1569, 0
      %v1626 = vsel %vm640, %v1570, 0
      %v1629 = vsel %vm640, %v1571, 0
      %v1632 = vsel %vm640, %v1572, 0
      %v1635 = vsel %vm640, %v1573, 0
      %v1638 = vsel %vm640, %v1574, 0
      %v1641 = vsel %vm640, %v1575, 0
      %v1644 = vsel %vm640, %v1576, 0
      %1646 = vmatpush.msra.mxu0 0.0
      %1647 = vmatpush.msra.mxu0 0.0
      %1648 = vmatpush.msra.mxu0 0.0
      %1649 = vmatpush.msra.mxu0 0.0
      %1650 = vmatpush.msra.mxu0 0.0
      %1651 = vmatpush.msra.mxu0 0.0
      %1652 = vmatpush.msra.mxu0 0.0
      %1653 = vmatpush.msra.mxu0 0.0
      %1654 = vmatpush.msra.mxu0 0.0
      %1655 = vmatpush.msra.mxu0 0.0
      %1656 = vmatpush.msra.mxu0 0.0
      %1657 = vmatpush.msra.mxu0 0.0
      %1658 = vmatpush.msra.mxu0 %v1567
      %1659 = vmatpush.msra.mxu0 %v1566
      %1660 = vmatpush.msra.mxu0 %v1565
      %1661 = vmatpush.msra.mxu0 %v1564
      %1662 = vmatmul.f32.gmra.mxu0 %v1623
      %v1663 = vpop.f32.mrf.mxu0
      %v1664 = vadd.f32 %v1589, %v1663
      %1665 = vmatmul.f32.gmra.mxu0 %v1626
      %v1666 = vpop.f32.mrf.mxu0
      %v1667 = vadd.f32 %v1594, %v1666
      %1668 = vmatmul.f32.gmra.mxu0 %v1629
      %v1669 = vpop.f32.mrf.mxu0
      %v1670 = vadd.f32 %v1599, %v1669
      %1671 = vmatmul.f32.gmra.mxu0 %v1632
      %v1672 = vpop.f32.mrf.mxu0
      %v1673 = vadd.f32 %v1604, %v1672
      %1674 = vmatmul.f32.gmra.mxu0 %v1635
      %v1675 = vpop.f32.mrf.mxu0
      %1676 = vmatmul.f32.gmra.mxu0 %v1638
      %v1677 = vpop.f32.mrf.mxu0
      %1678 = vmatmul.f32.gmra.mxu0 %v1641
      %v1679 = vpop.f32.mrf.mxu0
      %1680 = vmatmul.f32.gmra.mxu0 %v1644
      %v1681 = vpop.f32.mrf.mxu0
      %1682 = vdwg.mxu0
      %v1683 = vld [vmem:[#allocation3] sm:$0xff]
      %v1684 = vld [vmem:[#allocation3 + $0x8] sm:$0xff]
      %v1685 = vld [vmem:[#allocation3 + $0x10] sm:$0xff]
      %v1686 = vld [vmem:[#allocation3 + $0x18] sm:$0xff]
      %v1687 = vadd.f32 %v1683, %v1664
      %v1688 = vadd.f32 %v1684, %v1667
      %v1689 = vadd.f32 %v1685, %v1670
      %v1690 = vadd.f32 %v1686, %v1673
      %1691 = vst.msk [vmem:[#allocation3] sm:$0xff] %vm544, %v1687
      %1692 = vst.msk [vmem:[#allocation3 + $0x8] sm:$0xff] %vm544, %v1688
      %1693 = vst.msk [vmem:[#allocation3 + $0x10] sm:$0xff] %vm544, %v1689
      %1694 = vst.msk [vmem:[#allocation3 + $0x18] sm:$0xff] %vm544, %v1690
      %v1695 = vld [vmem:[#allocation3] sm:$0xff]
      %v1696 = vld [vmem:[#allocation3 + $0x8] sm:$0xff]
      %v1697 = vld [vmem:[#allocation3 + $0x10] sm:$0xff]
      %v1698 = vld [vmem:[#allocation3 + $0x18] sm:$0xff]
      %v1699 = vmul.f32 %v1695, %v512
      %v1700 = vmul.f32 %v1696, %v512
      %v1701 = vmul.f32 %v1697, %v512
      %v1702 = vmul.f32 %v1698, %v512
      %v1703 = vld [vmem:[%s10] sm:$0xff]
      %v1704 = vld [vmem:[%s10 + $0x8] sm:$0xff]
      %v1705 = vld [vmem:[%s11] sm:$0xff]
      %v1706 = vld [vmem:[%s11 + $0x8] sm:$0xff]
      %1708 = vset.pattern.permute.xlu0 0
      %1709 = vperm.xlu0 %1708, %v1705
      %v1710 = vpop.permute.xlu0 %1709
      %1713 = vset.pattern.permute.xlu0 0
      %1714 = vperm.xlu0 %1713, %v1706
      %v1715 = vpop.permute.xlu0 %1714
      %v1718 = vsel %vm640, %v1703, 0
      %v1721 = vsel %vm640, %v1704, 0
      %1723 = vmatpush.msra.mxu0 0.0
      %1724 = vmatpush.msra.mxu0 0.0
      %1725 = vmatpush.msra.mxu0 0.0
      %1726 = vmatpush.msra.mxu0 0.0
      %1727 = vmatpush.msra.mxu0 0.0
      %1728 = vmatpush.msra.mxu0 0.0
      %1729 = vmatpush.msra.mxu0 0.0
      %1730 = vmatpush.msra.mxu0 0.0
      %1731 = vmatpush.msra.mxu0 0.0
      %1732 = vmatpush.msra.mxu0 0.0
      %1733 = vmatpush.msra.mxu0 0.0
      %1734 = vmatpush.msra.mxu0 0.0
      %1735 = vmatpush.msra.mxu0 %v1702
      %1736 = vmatpush.msra.mxu0 %v1701
      %1737 = vmatpush.msra.mxu0 %v1700
      %1738 = vmatpush.msra.mxu0 %v1699
      %1739 = vmatmul.f32.gmra.mxu0 %v1718
      %v1740 = vpop.f32.mrf.mxu0
      %v1741 = vadd.f32 %v1710, %v1740
      %1742 = vmatmul.f32.gmra.mxu0 %v1721
      %v1743 = vpop.f32.mrf.mxu0
      %v1744 = vadd.f32 %v1715, %v1743
      %1745 = vdwg.mxu0
      %v1746 = vmul.f32 %v1744, 1.442695
      %v1747 = vpow.pop %v1746
      %v1748 = vmul.f32 %v1747, %v515
      %v1749 = vadd.f32 %v1741, %v1748
      %v1750 = vmul.f32 %v1749, %v512
      %1751 = vst.msk [vmem:[%s460] sm:$0xff] %vm544, %v514
      %1752 = vst.msk [vmem:[%s460 + $0x8] sm:$0xff] %vm544, %v1750
      %v1753 = vmul.f32 %v1744, %v512
      %v1754 = vsel %vm544, %v1753, 0.0
      %1755 = vadd.xlane.f32.xlu0 %v1754
      %v1756 = vpop.xlane.xlu0 %1755
      %v1757 = vrot.slane %v1756, 4
      %v1758 = vadd.f32 %v1756, %v1757
      %v1759 = vrot.slane %v1758, 2
      %v1760 = vadd.f32 %v1758, %v1759
      %v1761 = vrot.slane %v1760, 1
      %v1762 = vadd.f32 %v1760, %v1761
      %vm1763 = vcmask 0
      %1764 = vst.msk [vmem:[%s463] sm:$0x1] %vm1763, %v1762
      %p1765 = scmp.lt.s32.totalorder %s25, 1
      %s1766 = scalar_select %p1765, %s25, 1
      %s1767 = smul.addr %s1766, 2
      %s1768 = smul.addr %s1767, 8
      %s1769 = scalar_lea.vmem %s12, %s1768
      %p1770 = scmp.lt.s32.totalorder %s25, 1
      %s1771 = scalar_select %p1770, %s25, 1
      %s1772 = scalar_lea.vmem %s13, %s1771
      // Predicated region
      $region69: #{pallas_forward.2} parent=67 // pred_check
        %p1773 = pneg %p305
      $region70: #{pallas_forward.2} parent=67 // pred_check_branch
        %1775 = sbr.rel (%p1773) target = $region72
      $region71: #{pallas_forward.2} parent=67 // pred_region
        _
      $region72: #{pallas_forward.2} parent=67 // pred_fallthru
        _
      // Predicated region
      $region73: #{pallas_forward.2} parent=67 // pred_check
        %p1776 = pneg %p331
      $region74: #{pallas_forward.2} parent=67 // pred_check_branch
        %1778 = sbr.rel (%p1776) target = $region76
      $region75: #{pallas_forward.2} parent=67 // pred_region
        _
      $region76: #{pallas_forward.2} parent=67 // pred_fallthru
        _
    $region68: #{pallas_forward.2} parent=5 // pred_fallthru
      _
    %p1779 = scmp.le.s32.totalorder 2, %s20
    // Predicated region
    $region77: #{pallas_forward.2} parent=5 // pred_check
      %p1780 = pneg %p1779
    $region78: #{pallas_forward.2} parent=5 // pred_check_branch
      %1782 = sbr.rel (%p1780) target = $region80
    $region79: #{pallas_forward.2} parent=5 // pred_region
      %s1783 = ssub.s32 %s20, 2
      // Predicated region
      $region81: #{pallas_forward.2} parent=79 // pred_check
        %p1784 = pneg %p311
      $region82: #{pallas_forward.2} parent=79 // pred_check_branch
        %1786 = sbr.rel (%p1784) target = $region84
      $region83: #{pallas_forward.2} parent=79 // pred_region
        %p1787 = scmp.lt.s32.totalorder %s26, 1
        %s1788 = scalar_select %p1787, %s26, 1
        %s1789 = smul.addr %s1788, 2
        %s1790 = smul.addr %s1789, 8
        %s1791 = scalar_lea.vmem %s12, %s1790
      $region84: #{pallas_forward.2} parent=79 // pred_fallthru
        _
      // Predicated region
      $region85: #{pallas_forward.2} parent=79 // pred_check
        %p1792 = pneg %p337
      $region86: #{pallas_forward.2} parent=79 // pred_check_branch
        %1794 = sbr.rel (%p1792) target = $region88
      $region87: #{pallas_forward.2} parent=79 // pred_region
        %p1795 = scmp.lt.s32.totalorder %s26, 1
        %s1796 = scalar_select %p1795, %s26, 1
        %s1797 = scalar_lea.vmem %s13, %s1796
      $region88: #{pallas_forward.2} parent=79 // pred_fallthru
        _
    $region80: #{pallas_forward.2} parent=5 // pred_fallthru
      _
  $region6: #{pallas_forward.2} parent=0 // loop_footer
    %s24 = sadd.s32 1, %s20
  $region7: #{pallas_forward.2} parent=0 // loop_footer_branch
    %19 = sbr.rel target = $region3
  $region8: #{pallas_forward.2} parent=0 // loop_exit
    _

</llo_original>
